<compile_context>
chip_gen: v7x
topology: tpu7x:2x2x1
jax: 0.10.0
libtpu: 0.0.40
codegen_flags: <defaults>
</compile_context>

<pallas_src>
import functools

import jax
import jax.numpy as jnp
from jax.experimental import pallas as pl
from jax.experimental.pallas import tpu as pltpu

_LANE = 128  # vreg lane width


def _round_up(x, m):
    return (x + m - 1) // m * m


def _gelu(x, approx_tanh=False):
    # PyTorch nn.GELU() default = exact erf GELU (computed in f32).
    # approx_tanh=True routes the transcendental to the EUP (exact erf lowers
    # to a VALU polynomial) at the cost of a tiny numerical difference.
    if approx_tanh:
        c = jnp.float32(0.7978845608028654)  # sqrt(2/pi)
        return 0.5 * x * (1.0 + jnp.tanh(c * (x + 0.044715 * x * x * x)))
    return 0.5 * x * (1.0 + jax.lax.erf(x * jnp.float32(0.7071067811865476)))


def mlp_kernel(x_ref, w_pre_ref, b_pre_ref, w_hid_ref, b_hid_ref,
               w_post_ref, b_post_ref, o_ref, *, n_layers, res, approx_gelu):
    mm_dtype = w_pre_ref.dtype          # matmul input dtype (bf16 or f32)
    # x streamed in its original HBM dtype; cast per tile on the VPU (free
    # under the pipeline; avoids a separate pad/convert pre-pass over HBM).
    x = x_ref[...].astype(mm_dtype)

    # linear_pre + act  (f32 MXU accumulation, f32 bias/GELU)
    h = jnp.dot(x, w_pre_ref[...], preferred_element_type=jnp.float32)
    h = _gelu(h + b_pre_ref[...], approx_gelu)

    def layer(i, h):
        z = jnp.dot(h.astype(mm_dtype), w_hid_ref[i],
                    preferred_element_type=jnp.float32)
        z = _gelu(z + b_hid_ref[i], approx_gelu)
        return z + h if res else z

    if n_layers <= 4:
        for i in range(n_layers):               # shallow: static unroll
            h = layer(i, h)
    else:
        h = jax.lax.fori_loop(0, n_layers, layer, h)   # deep: bound live ranges

    # linear_post
    y = jnp.dot(h.astype(mm_dtype), w_post_ref[...],
                preferred_element_type=jnp.float32)
    y = y + b_post_ref[...]
    o_ref[...] = y.astype(o_ref.dtype)


def prepare_params(params, compute_dtype=jnp.bfloat16):
    """Pad all feature dims to the 128-lane vreg width and cast the weights to
    the matmul compute dtype ONCE.  Cache/reuse the result across forward
    calls (padding is exact: padded weights/biases are zero and GELU(0)=0)."""
    w_pre, b_pre, w_hid, b_hid, w_post, b_post = params
    n_input, n_hidden = w_pre.shape
    n_output = w_post.shape[1]
    n_layers = w_hid.shape[0]
    n_in_p = _round_up(n_input, _LANE)
    n_hid_p = _round_up(n_hidden, _LANE)
    n_out_p = _round_up(n_output, _LANE)

    def pad2(a, r, c):
        return jnp.pad(a, ((0, r - a.shape[0]), (0, c - a.shape[1])))

    return dict(
        w_pre=pad2(w_pre, n_in_p, n_hid_p).astype(compute_dtype),
        b_pre=pad2(b_pre, 1, n_hid_p).astype(jnp.float32),
        w_hid=jnp.pad(w_hid, ((0, 0), (0, n_hid_p - n_hidden),
                              (0, n_hid_p - n_hidden))).astype(compute_dtype),
        b_hid=jnp.pad(b_hid, ((0, 0), (0, 0),
                              (0, n_hid_p - n_hidden))).astype(jnp.float32),
        w_post=pad2(w_post, n_hid_p, n_out_p).astype(compute_dtype),
        b_post=pad2(b_post, 1, n_out_p).astype(jnp.float32),
        dims=(n_input, n_hidden, n_output, n_layers, n_in_p, n_hid_p, n_out_p),
        compute_dtype=jnp.dtype(compute_dtype),
    )


def mlp_pallas_prepared(x, prepped, *, res=True, tile_rows=512,
                        approx_gelu=False, single_buffer_weights=True,
                        vmem_limit_bytes=None):
    """x: (B, N, n_input). Returns (B, N, n_output) in x.dtype."""
    (n_input, n_hidden, n_output, n_layers,
     n_in_p, n_hid_p, n_out_p) = prepped["dims"]
    compute_dtype = prepped["compute_dtype"]
    B, N, in_dim = x.shape
    assert in_dim == n_input
    out_dtype = x.dtype

    # ---- row tiling ----
    # bf16 packs 2 rows per sublane -> 16-align; f32 -> 8-align.
    row_align = {4: 8, 2: 16, 1: 32}.get(compute_dtype.itemsize, 8)
    M = B * N
    tile_rows = max(row_align, _round_up(int(tile_rows), row_align))
    # Keep >= 2 grid steps whenever M allows so v7x's 2 TensorCores both work.
    # NOTE: on v5e, sweeping tile_rows=256 (vs 512) can reduce VMEM spill.
    tile_rows = min(tile_rows,
                    max(row_align, _round_up(pl.cdiv(M, 2), row_align)))
    M_p = _round_up(M, tile_rows)
    grid = (M_p // tile_rows,)

    # x stays in its original dtype; pad only when shapes require it.
    x2d = x.reshape(M, n_input)
    if M_p != M or n_in_p != n_input:
        x2d = jnp.pad(x2d, ((0, M_p - M), (0, n_in_p - n_input)))

    w_pre_p, b_pre_p = prepped["w_pre"], prepped["b_pre"]
    w_hid_p, b_hid_p = prepped["w_hid"], prepped["b_hid"]
    w_post_p, b_post_p = prepped["w_post"], prepped["b_post"]

    kernel = functools.partial(mlp_kernel, n_layers=n_layers, res=res,
                               approx_gelu=approx_gelu)

    # Advisory cost estimate so XLA can schedule/overlap this custom call.
    cit = compute_dtype.itemsize
    flops = 2 * M_p * (n_in_p * n_hid_p + n_layers * n_hid_p * n_hid_p
                       + n_hid_p * n_out_p)
    transcendentals = M_p * n_hid_p * (n_layers + 1)           # one per GELU
    weight_bytes = ((w_pre_p.size + w_hid_p.size + w_post_p.size) * cit
                    + (b_pre_p.size + b_hid_p.size + b_post_p.size) * 4)
    bytes_accessed = (x2d.size * x2d.dtype.itemsize
                      + M_p * n_out_p * jnp.dtype(out_dtype).itemsize
                      + weight_bytes)
    cost = pl.CostEstimate(flops=flops, transcendentals=transcendentals,
                           bytes_accessed=bytes_accessed)

    def run(use_single_buffer):
        # Weights/biases have constant index maps (never re-fetched); single-
        # buffer them so resident weights don't take 2x VMEM (v7x: 64 MiB).
        if use_single_buffer:
            def wspec(shape):
                return pl.BlockSpec(shape, lambda i, _s=shape: (0,) * len(_s),
                                    pipeline_mode=pl.Buffered(1))
        else:
            def wspec(shape):
                return pl.BlockSpec(shape, lambda i, _s=shape: (0,) * len(_s))

        if vmem_limit_bytes is None:
            wbufs = 1 if use_single_buffer else 2
            need = (wbufs * weight_bytes
                    + 2 * tile_rows * n_in_p * x2d.dtype.itemsize
                    + 2 * tile_rows * n_out_p * jnp.dtype(out_dtype).itemsize
                    + 4 * tile_rows * n_hid_p * 4)   # f32 h/z headroom
            vmem_limit = int(min(64 << 20, max(16 << 20, need + (8 << 20))))
        else:
            vmem_limit = int(vmem_limit_bytes)

        return pl.pallas_call(
            kernel,
            out_shape=jax.ShapeDtypeStruct((M_p, n_out_p), out_dtype),
            grid_spec=pltpu.PrefetchScalarGridSpec(
                num_scalar_prefetch=0,
                grid=grid,
                in_specs=[
                    pl.BlockSpec((tile_rows, n_in_p), lambda i: (i, 0)),
                    wspec((n_in_p, n_hid_p)),
                    wspec((1, n_hid_p)),
                    wspec((n_layers, n_hid_p, n_hid_p)),
                    wspec((n_layers, 1, n_hid_p)),
                    wspec((n_hid_p, n_out_p)),
                    wspec((1, n_out_p)),
                ],
                out_specs=pl.BlockSpec((tile_rows, n_out_p), lambda i: (i, 0)),
            ),
            compiler_params=pltpu.CompilerParams(
                dimension_semantics=("parallel",),
                vmem_limit_bytes=vmem_limit),
            cost_estimate=cost,
        )(x2d, w_pre_p, b_pre_p, w_hid_p, b_hid_p, w_post_p, b_post_p)

    if single_buffer_weights:
        try:
            out2d = run(True)
        except Exception:
            # pipeline_mode / Buffered(1) unsupported -> default double-buffer.
            out2d = run(False)
    else:
        out2d = run(False)

    if M_p != M or n_out_p != n_output:
        out2d = out2d[:M, :n_output]
    return out2d.reshape(B, N, n_output)


def mlp_pallas(x, params, *, n_layers=None, res=True, tile_rows=512,
               compute_dtype=jnp.bfloat16, approx_gelu=False,
               single_buffer_weights=True, vmem_limit_bytes=None):
    """Convenience wrapper: prepares (pads + casts) params then runs the kernel.
    For repeated inference calls, call prepare_params() once and reuse it."""
    prepped = prepare_params(params, compute_dtype=compute_dtype)
    if n_layers is not None:
        assert n_layers == prepped["dims"][3]
    return mlp_pallas_prepared(x, prepped, res=res, tile_rows=tile_rows,
                               approx_gelu=approx_gelu,
                               single_buffer_weights=single_buffer_weights,
                               vmem_limit_bytes=vmem_limit_bytes)


def mlp_reference(x, params, *, n_layers, res=True):
    """Plain-JAX reference matching the PyTorch module forward (f32)."""
    w_pre, b_pre, w_hid, b_hid, w_post, b_post = params
    h = _gelu(x @ w_pre + b_pre[0])
    for i in range(n_layers):
        z = _gelu(h @ w_hid[i] + b_hid[i, 0])
        h = z + h if res else z
    return h @ w_post + b_post[0]


def init_params(key, n_input, n_hidden, n_output, n_layers):
    ks = jax.random.split(key, 6)
    scale = 0.1
    w_pre = scale * jax.random.normal(ks[0], (n_input, n_hidden), jnp.float32)
    b_pre = scale * jax.random.normal(ks[1], (1, n_hidden), jnp.float32)
    w_hid = scale * jax.random.normal(ks[2], (n_layers, n_hidden, n_hidden),
                                      jnp.float32)
    b_hid = scale * jax.random.normal(ks[3], (n_layers, 1, n_hidden),
                                      jnp.float32)
    w_post = scale * jax.random.normal(ks[4], (n_hidden, n_output),
                                       jnp.float32)
    b_post = scale * jax.random.normal(ks[5], (1, n_output), jnp.float32)
    return (w_pre, b_pre, w_hid, b_hid, w_post, b_post)


if __name__ == "__main__":
    # Small shapes consistent with MLP(fun_dim -> n_hidden -> out_dim) usage.
    B, N = 2, 16          # batch, number of points/tokens
    n_input, n_hidden, n_output = 16, 32, 8
    n_layers = 2
    res = True

    key = jax.random.PRNGKey(0)
    kx, kp = jax.random.split(key)
    x = jax.random.normal(kx, (B, N, n_input), jnp.float32)
    params = init_params(kp, n_input, n_hidden, n_output, n_layers)

    ref = mlp_reference(x, params, n_layers=n_layers, res=res)

    # Default path: bf16 matmul inputs, f32 accumulation; params prepared once
    # (padded + cast) and reused — loose tolerance for bf16 rounding.
    prepped_bf16 = prepare_params(params, compute_dtype=jnp.bfloat16)
    out_bf16 = mlp_pallas_prepared(x, prepped_bf16, res=res)
    out_bf16 = jax.block_until_ready(out_bf16)
    assert out_bf16.shape == (B, N, n_output)
    assert jnp.allclose(out_bf16, ref, atol=1e-1, rtol=1e-1)

    # f32 matmul path (bit-accurate vs the exact-erf GELU reference).
    out_f32 = mlp_pallas(x, params, n_layers=n_layers, res=res,
                         compute_dtype=jnp.float32)
    out_f32 = jax.block_until_ready(out_f32)
    assert out_f32.shape == (B, N, n_output)
    assert jnp.allclose(out_f32, ref, atol=1e-4, rtol=1e-4)

    print("KERNEL_OK")
</pallas_src>

<mosaic_0001>
module attributes {stable_mosaic.version = 11 : i64} {
  func.func @mlp_kernel(%arg0: i32, %arg1: memref<16x128xf32, #tpu.memory_space<vmem>>, %arg2: memref<128x128xbf16, #tpu.memory_space<vmem>>, %arg3: memref<1x128xf32, #tpu.memory_space<vmem>>, %arg4: memref<2x128x128xbf16, #tpu.memory_space<vmem>>, %arg5: memref<2x1x128xf32, #tpu.memory_space<vmem>>, %arg6: memref<128x128xbf16, #tpu.memory_space<vmem>>, %arg7: memref<1x128xf32, #tpu.memory_space<vmem>>, %arg8: memref<16x128xf32, #tpu.memory_space<vmem>>) attributes {dimension_semantics = [#tpu.dimension_semantics<parallel>], iteration_bounds = array<i64: 2>, scalar_prefetch = 0 : i64, scratch_operands = 0 : i64, tpu.core_type = #tpu.core_type<tc>, window_params = [{transform_indices = @transform_0, window_bounds = array<i64: 16, 128>}, {pipeline_mode = #tpu.pipeline_mode<synchronous>, transform_indices = @transform_1, window_bounds = array<i64: 128, 128>}, {pipeline_mode = #tpu.pipeline_mode<synchronous>, transform_indices = @transform_2, window_bounds = array<i64: 1, 128>}, {pipeline_mode = #tpu.pipeline_mode<synchronous>, transform_indices = @transform_3, window_bounds = array<i64: 2, 128, 128>}, {pipeline_mode = #tpu.pipeline_mode<synchronous>, transform_indices = @transform_4, window_bounds = array<i64: 2, 1, 128>}, {pipeline_mode = #tpu.pipeline_mode<synchronous>, transform_indices = @transform_5, window_bounds = array<i64: 128, 128>}, {pipeline_mode = #tpu.pipeline_mode<synchronous>, transform_indices = @transform_6, window_bounds = array<i64: 1, 128>}, {transform_indices = @transform_7, window_bounds = array<i64: 16, 128>}]} {
    %c0 = arith.constant 0 : index
    %c0_0 = arith.constant 0 : index
    %0 = vector.load %arg1[%c0, %c0_0] : memref<16x128xf32, #tpu.memory_space<vmem>>, vector<16x128xf32>
    %1 = arith.truncf %0 : vector<16x128xf32> to vector<16x128xbf16>
    %c0_1 = arith.constant 0 : index
    %c0_2 = arith.constant 0 : index
    %2 = vector.load %arg2[%c0_1, %c0_2] : memref<128x128xbf16, #tpu.memory_space<vmem>>, vector<128x128xbf16>
    %cst = arith.constant dense<0.000000e+00> : vector<16x128xf32>
    %3 = tpu.matmul %1, %2, %cst {dimension_numbers = #tpu.dot_dimension_numbers<[1], [0], [0], [1], [0, 0, 1, 1], [], []>} : vector<16x128xbf16>, vector<128x128xbf16>, vector<16x128xf32> -> vector<16x128xf32>
    %c0_3 = arith.constant 0 : index
    %c0_4 = arith.constant 0 : index
    %4 = vector.load %arg3[%c0_3, %c0_4] : memref<1x128xf32, #tpu.memory_space<vmem>>, vector<1x128xf32>
    %5 = vector.broadcast %4 : vector<1x128xf32> to vector<16x128xf32>
    %6 = arith.addf %3, %5 : vector<16x128xf32>
    %cst_5 = arith.constant 5.000000e-01 : f32
    %7 = vector.broadcast %cst_5 : f32 to vector<16x128xf32>
    %8 = arith.mulf %7, %6 : vector<16x128xf32>
    %cst_6 = arith.constant 0.707106769 : f32
    %9 = vector.broadcast %cst_6 : f32 to vector<16x128xf32>
    %10 = arith.mulf %6, %9 : vector<16x128xf32>
    %11 = math.erf %10 : vector<16x128xf32>
    %cst_7 = arith.constant 1.000000e+00 : f32
    %12 = vector.broadcast %cst_7 : f32 to vector<16x128xf32>
    %13 = arith.addf %12, %11 : vector<16x128xf32>
    %14 = arith.mulf %8, %13 : vector<16x128xf32>
    %15 = arith.truncf %14 : vector<16x128xf32> to vector<16x128xbf16>
    %c0_8 = arith.constant 0 : index
    %c0_9 = arith.constant 0 : index
    %c0_10 = arith.constant 0 : index
    %16 = vector.load %arg4[%c0_8, %c0_9, %c0_10] : memref<2x128x128xbf16, #tpu.memory_space<vmem>>, vector<1x128x128xbf16>
    %17 = vector.shape_cast %16 : vector<1x128x128xbf16> to vector<128x128xbf16>
    %cst_11 = arith.constant dense<0.000000e+00> : vector<16x128xf32>
    %18 = tpu.matmul %15, %17, %cst_11 {dimension_numbers = #tpu.dot_dimension_numbers<[1], [0], [0], [1], [0, 0, 1, 1], [], []>} : vector<16x128xbf16>, vector<128x128xbf16>, vector<16x128xf32> -> vector<16x128xf32>
    %c0_12 = arith.constant 0 : index
    %c0_13 = arith.constant 0 : index
    %c0_14 = arith.constant 0 : index
    %19 = vector.load %arg5[%c0_12, %c0_13, %c0_14] : memref<2x1x128xf32, #tpu.memory_space<vmem>>, vector<1x1x128xf32>
    %20 = vector.shape_cast %19 : vector<1x1x128xf32> to vector<1x128xf32>
    %21 = vector.broadcast %20 : vector<1x128xf32> to vector<16x128xf32>
    %22 = arith.addf %18, %21 : vector<16x128xf32>
    %cst_15 = arith.constant 5.000000e-01 : f32
    %23 = vector.broadcast %cst_15 : f32 to vector<16x128xf32>
    %24 = arith.mulf %23, %22 : vector<16x128xf32>
    %cst_16 = arith.constant 0.707106769 : f32
    %25 = vector.broadcast %cst_16 : f32 to vector<16x128xf32>
    %26 = arith.mulf %22, %25 : vector<16x128xf32>
    %27 = math.erf %26 : vector<16x128xf32>
    %cst_17 = arith.constant 1.000000e+00 : f32
    %28 = vector.broadcast %cst_17 : f32 to vector<16x128xf32>
    %29 = arith.addf %28, %27 : vector<16x128xf32>
    %30 = arith.mulf %24, %29 : vector<16x128xf32>
    %31 = arith.addf %30, %14 : vector<16x128xf32>
    %32 = arith.truncf %31 : vector<16x128xf32> to vector<16x128xbf16>
    %c1 = arith.constant 1 : index
    %c0_18 = arith.constant 0 : index
    %c0_19 = arith.constant 0 : index
    %33 = vector.load %arg4[%c1, %c0_18, %c0_19] : memref<2x128x128xbf16, #tpu.memory_space<vmem>>, vector<1x128x128xbf16>
    %34 = vector.shape_cast %33 : vector<1x128x128xbf16> to vector<128x128xbf16>
    %cst_20 = arith.constant dense<0.000000e+00> : vector<16x128xf32>
    %35 = tpu.matmul %32, %34, %cst_20 {dimension_numbers = #tpu.dot_dimension_numbers<[1], [0], [0], [1], [0, 0, 1, 1], [], []>} : vector<16x128xbf16>, vector<128x128xbf16>, vector<16x128xf32> -> vector<16x128xf32>
    %c1_21 = arith.constant 1 : index
    %c0_22 = arith.constant 0 : index
    %c0_23 = arith.constant 0 : index
    %36 = vector.load %arg5[%c1_21, %c0_22, %c0_23] : memref<2x1x128xf32, #tpu.memory_space<vmem>>, vector<1x1x128xf32>
    %37 = vector.shape_cast %36 : vector<1x1x128xf32> to vector<1x128xf32>
    %38 = vector.broadcast %37 : vector<1x128xf32> to vector<16x128xf32>
    %39 = arith.addf %35, %38 : vector<16x128xf32>
    %cst_24 = arith.constant 5.000000e-01 : f32
    %40 = vector.broadcast %cst_24 : f32 to vector<16x128xf32>
    %41 = arith.mulf %40, %39 : vector<16x128xf32>
    %cst_25 = arith.constant 0.707106769 : f32
    %42 = vector.broadcast %cst_25 : f32 to vector<16x128xf32>
    %43 = arith.mulf %39, %42 : vector<16x128xf32>
    %44 = math.erf %43 : vector<16x128xf32>
    %cst_26 = arith.constant 1.000000e+00 : f32
    %45 = vector.broadcast %cst_26 : f32 to vector<16x128xf32>
    %46 = arith.addf %45, %44 : vector<16x128xf32>
    %47 = arith.mulf %41, %46 : vector<16x128xf32>
    %48 = arith.addf %47, %31 : vector<16x128xf32>
    %49 = arith.truncf %48 : vector<16x128xf32> to vector<16x128xbf16>
    %c0_27 = arith.constant 0 : index
    %c0_28 = arith.constant 0 : index
    %50 = vector.load %arg6[%c0_27, %c0_28] : memref<128x128xbf16, #tpu.memory_space<vmem>>, vector<128x128xbf16>
    %cst_29 = arith.constant dense<0.000000e+00> : vector<16x128xf32>
    %51 = tpu.matmul %49, %50, %cst_29 {dimension_numbers = #tpu.dot_dimension_numbers<[1], [0], [0], [1], [0, 0, 1, 1], [], []>} : vector<16x128xbf16>, vector<128x128xbf16>, vector<16x128xf32> -> vector<16x128xf32>
    %c0_30 = arith.constant 0 : index
    %c0_31 = arith.constant 0 : index
    %52 = vector.load %arg7[%c0_30, %c0_31] : memref<1x128xf32, #tpu.memory_space<vmem>>, vector<1x128xf32>
    %53 = vector.broadcast %52 : vector<1x128xf32> to vector<16x128xf32>
    %54 = arith.addf %51, %53 : vector<16x128xf32>
    %c0_32 = arith.constant 0 : index
    %c0_33 = arith.constant 0 : index
    %55 = vector.load %arg8[%c0_32, %c0_33] : memref<16x128xf32, #tpu.memory_space<vmem>>, vector<16x128xf32>
    tpu.vector_store %arg8[%c0_32, %c0_33], %54 {strides = array<i32>} : memref<16x128xf32, #tpu.memory_space<vmem>>, vector<16x128xf32>,
    return
  }
  func.func @transform_0(%arg0: i32) -> (i32, i32) {
    %c0_i32 = arith.constant 0 : i32
    %c0_i32_0 = arith.constant 0 : i32
    return %arg0, %c0_i32 : i32, i32
  }
  func.func @transform_1(%arg0: i32) -> (i32, i32) {
    %c0_i32 = arith.constant 0 : i32
    %c0_i32_0 = arith.constant 0 : i32
    %c0_i32_1 = arith.constant 0 : i32
    return %c0_i32, %c0_i32_0 : i32, i32
  }
  func.func @transform_2(%arg0: i32) -> (i32, i32) {
    %c0_i32 = arith.constant 0 : i32
    %c0_i32_0 = arith.constant 0 : i32
    %c0_i32_1 = arith.constant 0 : i32
    return %c0_i32, %c0_i32_0 : i32, i32
  }
  func.func @transform_3(%arg0: i32) -> (i32, i32, i32) {
    %c0_i32 = arith.constant 0 : i32
    %c0_i32_0 = arith.constant 0 : i32
    %c0_i32_1 = arith.constant 0 : i32
    %c0_i32_2 = arith.constant 0 : i32
    return %c0_i32, %c0_i32_0, %c0_i32_1 : i32, i32, i32
  }
  func.func @transform_4(%arg0: i32) -> (i32, i32, i32) {
    %c0_i32 = arith.constant 0 : i32
    %c0_i32_0 = arith.constant 0 : i32
    %c0_i32_1 = arith.constant 0 : i32
    %c0_i32_2 = arith.constant 0 : i32
    return %c0_i32, %c0_i32_0, %c0_i32_1 : i32, i32, i32
  }
  func.func @transform_5(%arg0: i32) -> (i32, i32) {
    %c0_i32 = arith.constant 0 : i32
    %c0_i32_0 = arith.constant 0 : i32
    %c0_i32_1 = arith.constant 0 : i32
    return %c0_i32, %c0_i32_0 : i32, i32
  }
  func.func @transform_6(%arg0: i32) -> (i32, i32) {
    %c0_i32 = arith.constant 0 : i32
    %c0_i32_0 = arith.constant 0 : i32
    %c0_i32_1 = arith.constant 0 : i32
    return %c0_i32, %c0_i32_0 : i32, i32
  }
  func.func @transform_7(%arg0: i32) -> (i32, i32) {
    %c0_i32 = arith.constant 0 : i32
    %c0_i32_0 = arith.constant 0 : i32
    return %arg0, %c0_i32 : i32, i32
  }
}

module attributes {stable_mosaic.version = 11 : i64} {
  func.func @mlp_kernel(%arg0: i32, %arg1: memref<16x128xf32, #tpu.memory_space<vmem>>, %arg2: memref<128x128xbf16, #tpu.memory_space<vmem>>, %arg3: memref<1x128xf32, #tpu.memory_space<vmem>>, %arg4: memref<2x128x128xbf16, #tpu.memory_space<vmem>>, %arg5: memref<2x1x128xf32, #tpu.memory_space<vmem>>, %arg6: memref<128x128xbf16, #tpu.memory_space<vmem>>, %arg7: memref<1x128xf32, #tpu.memory_space<vmem>>, %arg8: memref<16x128xf32, #tpu.memory_space<vmem>>) attributes {dimension_semantics = [#tpu.dimension_semantics<parallel>], iteration_bounds = array<i64: 2>, scalar_prefetch = 0 : i64, scratch_operands = 0 : i64, tpu.core_type = #tpu.core_type<tc>, window_params = [{transform_indices = @transform_0, window_bounds = array<i64: 16, 128>}, {pipeline_mode = #tpu.pipeline_mode<synchronous>, transform_indices = @transform_1, window_bounds = array<i64: 128, 128>}, {pipeline_mode = #tpu.pipeline_mode<synchronous>, transform_indices = @transform_2, window_bounds = array<i64: 1, 128>}, {pipeline_mode = #tpu.pipeline_mode<synchronous>, transform_indices = @transform_3, window_bounds = array<i64: 2, 128, 128>}, {pipeline_mode = #tpu.pipeline_mode<synchronous>, transform_indices = @transform_4, window_bounds = array<i64: 2, 1, 128>}, {pipeline_mode = #tpu.pipeline_mode<synchronous>, transform_indices = @transform_5, window_bounds = array<i64: 128, 128>}, {pipeline_mode = #tpu.pipeline_mode<synchronous>, transform_indices = @transform_6, window_bounds = array<i64: 1, 128>}, {transform_indices = @transform_7, window_bounds = array<i64: 16, 128>}]} {
    %c0 = arith.constant 0 : index
    %c0_0 = arith.constant 0 : index
    %0 = vector.load %arg1[%c0, %c0_0] : memref<16x128xf32, #tpu.memory_space<vmem>>, vector<16x128xf32>
    %1 = arith.truncf %0 : vector<16x128xf32> to vector<16x128xbf16>
    %c0_1 = arith.constant 0 : index
    %c0_2 = arith.constant 0 : index
    %2 = vector.load %arg2[%c0_1, %c0_2] : memref<128x128xbf16, #tpu.memory_space<vmem>>, vector<128x128xbf16>
    %cst = arith.constant dense<0.000000e+00> : vector<16x128xf32>
    %3 = tpu.matmul %1, %2, %cst {dimension_numbers = #tpu.dot_dimension_numbers<[1], [0], [0], [1], [0, 0, 1, 1], [], []>} : vector<16x128xbf16>, vector<128x128xbf16>, vector<16x128xf32> -> vector<16x128xf32>
    %c0_3 = arith.constant 0 : index
    %c0_4 = arith.constant 0 : index
    %4 = vector.load %arg3[%c0_3, %c0_4] : memref<1x128xf32, #tpu.memory_space<vmem>>, vector<1x128xf32>
    %5 = vector.broadcast %4 : vector<1x128xf32> to vector<16x128xf32>
    %6 = arith.addf %3, %5 : vector<16x128xf32>
    %cst_5 = arith.constant 5.000000e-01 : f32
    %7 = vector.broadcast %cst_5 : f32 to vector<16x128xf32>
    %8 = arith.mulf %7, %6 : vector<16x128xf32>
    %cst_6 = arith.constant 0.707106769 : f32
    %9 = vector.broadcast %cst_6 : f32 to vector<16x128xf32>
    %10 = arith.mulf %6, %9 : vector<16x128xf32>
    %11 = math.erf %10 : vector<16x128xf32>
    %cst_7 = arith.constant 1.000000e+00 : f32
    %12 = vector.broadcast %cst_7 : f32 to vector<16x128xf32>
    %13 = arith.addf %12, %11 : vector<16x128xf32>
    %14 = arith.mulf %8, %13 : vector<16x128xf32>
    %15 = arith.truncf %14 : vector<16x128xf32> to vector<16x128xbf16>
    %c0_8 = arith.constant 0 : index
    %c0_9 = arith.constant 0 : index
    %c0_10 = arith.constant 0 : index
    %16 = vector.load %arg4[%c0_8, %c0_9, %c0_10] : memref<2x128x128xbf16, #tpu.memory_space<vmem>>, vector<1x128x128xbf16>
    %17 = vector.shape_cast %16 : vector<1x128x128xbf16> to vector<128x128xbf16>
    %cst_11 = arith.constant dense<0.000000e+00> : vector<16x128xf32>
    %18 = tpu.matmul %15, %17, %cst_11 {dimension_numbers = #tpu.dot_dimension_numbers<[1], [0], [0], [1], [0, 0, 1, 1], [], []>} : vector<16x128xbf16>, vector<128x128xbf16>, vector<16x128xf32> -> vector<16x128xf32>
    %c0_12 = arith.constant 0 : index
    %c0_13 = arith.constant 0 : index
    %c0_14 = arith.constant 0 : index
    %19 = vector.load %arg5[%c0_12, %c0_13, %c0_14] : memref<2x1x128xf32, #tpu.memory_space<vmem>>, vector<1x1x128xf32>
    %20 = vector.shape_cast %19 : vector<1x1x128xf32> to vector<1x128xf32>
    %21 = vector.broadcast %20 : vector<1x128xf32> to vector<16x128xf32>
    %22 = arith.addf %18, %21 : vector<16x128xf32>
    %cst_15 = arith.constant 5.000000e-01 : f32
    %23 = vector.broadcast %cst_15 : f32 to vector<16x128xf32>
    %24 = arith.mulf %23, %22 : vector<16x128xf32>
    %cst_16 = arith.constant 0.707106769 : f32
    %25 = vector.broadcast %cst_16 : f32 to vector<16x128xf32>
    %26 = arith.mulf %22, %25 : vector<16x128xf32>
    %27 = math.erf %26 : vector<16x128xf32>
    %cst_17 = arith.constant 1.000000e+00 : f32
    %28 = vector.broadcast %cst_17 : f32 to vector<16x128xf32>
    %29 = arith.addf %28, %27 : vector<16x128xf32>
    %30 = arith.mulf %24, %29 : vector<16x128xf32>
    %31 = arith.addf %30, %14 : vector<16x128xf32>
    %32 = arith.truncf %31 : vector<16x128xf32> to vector<16x128xbf16>
    %c1 = arith.constant 1 : index
    %c0_18 = arith.constant 0 : index
    %c0_19 = arith.constant 0 : index
    %33 = vector.load %arg4[%c1, %c0_18, %c0_19] : memref<2x128x128xbf16, #tpu.memory_space<vmem>>, vector<1x128x128xbf16>
    %34 = vector.shape_cast %33 : vector<1x128x128xbf16> to vector<128x128xbf16>
    %cst_20 = arith.constant dense<0.000000e+00> : vector<16x128xf32>
    %35 = tpu.matmul %32, %34, %cst_20 {dimension_numbers = #tpu.dot_dimension_numbers<[1], [0], [0], [1], [0, 0, 1, 1], [], []>} : vector<16x128xbf16>, vector<128x128xbf16>, vector<16x128xf32> -> vector<16x128xf32>
    %c1_21 = arith.constant 1 : index
    %c0_22 = arith.constant 0 : index
    %c0_23 = arith.constant 0 : index
    %36 = vector.load %arg5[%c1_21, %c0_22, %c0_23] : memref<2x1x128xf32, #tpu.memory_space<vmem>>, vector<1x1x128xf32>
    %37 = vector.shape_cast %36 : vector<1x1x128xf32> to vector<1x128xf32>
    %38 = vector.broadcast %37 : vector<1x128xf32> to vector<16x128xf32>
    %39 = arith.addf %35, %38 : vector<16x128xf32>
    %cst_24 = arith.constant 5.000000e-01 : f32
    %40 = vector.broadcast %cst_24 : f32 to vector<16x128xf32>
    %41 = arith.mulf %40, %39 : vector<16x128xf32>
    %cst_25 = arith.constant 0.707106769 : f32
    %42 = vector.broadcast %cst_25 : f32 to vector<16x128xf32>
    %43 = arith.mulf %39, %42 : vector<16x128xf32>
    %44 = math.erf %43 : vector<16x128xf32>
    %cst_26 = arith.constant 1.000000e+00 : f32
    %45 = vector.broadcast %cst_26 : f32 to vector<16x128xf32>
    %46 = arith.addf %45, %44 : vector<16x128xf32>
    %47 = arith.mulf %41, %46 : vector<16x128xf32>
    %48 = arith.addf %47, %31 : vector<16x128xf32>
    %49 = arith.truncf %48 : vector<16x128xf32> to vector<16x128xbf16>
    %c0_27 = arith.constant 0 : index
    %c0_28 = arith.constant 0 : index
    %50 = vector.load %arg6[%c0_27, %c0_28] : memref<128x128xbf16, #tpu.memory_space<vmem>>, vector<128x128xbf16>
    %cst_29 = arith.constant dense<0.000000e+00> : vector<16x128xf32>
    %51 = tpu.matmul %49, %50, %cst_29 {dimension_numbers = #tpu.dot_dimension_numbers<[1], [0], [0], [1], [0, 0, 1, 1], [], []>} : vector<16x128xbf16>, vector<128x128xbf16>, vector<16x128xf32> -> vector<16x128xf32>
    %c0_30 = arith.constant 0 : index
    %c0_31 = arith.constant 0 : index
    %52 = vector.load %arg7[%c0_30, %c0_31] : memref<1x128xf32, #tpu.memory_space<vmem>>, vector<1x128xf32>
    %53 = vector.broadcast %52 : vector<1x128xf32> to vector<16x128xf32>
    %54 = arith.addf %51, %53 : vector<16x128xf32>
    %c0_32 = arith.constant 0 : index
    %c0_33 = arith.constant 0 : index
    %55 = vector.load %arg8[%c0_32, %c0_33] : memref<16x128xf32, #tpu.memory_space<vmem>>, vector<16x128xf32>
    tpu.vector_store %arg8[%c0_32, %c0_33], %54 {strides = array<i32>} : memref<16x128xf32, #tpu.memory_space<vmem>>, vector<16x128xf32>,
    return
  }
  func.func @transform_0(%arg0: i32) -> (i32, i32) {
    %c0_i32 = arith.constant 0 : i32
    %c0_i32_0 = arith.constant 0 : i32
    return %arg0, %c0_i32 : i32, i32
  }
  func.func @transform_1(%arg0: i32) -> (i32, i32) {
    %c0_i32 = arith.constant 0 : i32
    %c0_i32_0 = arith.constant 0 : i32
    %c0_i32_1 = arith.constant 0 : i32
    return %c0_i32, %c0_i32_0 : i32, i32
  }
  func.func @transform_2(%arg0: i32) -> (i32, i32) {
    %c0_i32 = arith.constant 0 : i32
    %c0_i32_0 = arith.constant 0 : i32
    %c0_i32_1 = arith.constant 0 : i32
    return %c0_i32, %c0_i32_0 : i32, i32
  }
  func.func @transform_3(%arg0: i32) -> (i32, i32, i32) {
    %c0_i32 = arith.constant 0 : i32
    %c0_i32_0 = arith.constant 0 : i32
    %c0_i32_1 = arith.constant 0 : i32
    %c0_i32_2 = arith.constant 0 : i32
    return %c0_i32, %c0_i32_0, %c0_i32_1 : i32, i32, i32
  }
  func.func @transform_4(%arg0: i32) -> (i32, i32, i32) {
    %c0_i32 = arith.constant 0 : i32
    %c0_i32_0 = arith.constant 0 : i32
    %c0_i32_1 = arith.constant 0 : i32
    %c0_i32_2 = arith.constant 0 : i32
    return %c0_i32, %c0_i32_0, %c0_i32_1 : i32, i32, i32
  }
  func.func @transform_5(%arg0: i32) -> (i32, i32) {
    %c0_i32 = arith.constant 0 : i32
    %c0_i32_0 = arith.constant 0 : i32
    %c0_i32_1 = arith.constant 0 : i32
    return %c0_i32, %c0_i32_0 : i32, i32
  }
  func.func @transform_6(%arg0: i32) -> (i32, i32) {
    %c0_i32 = arith.constant 0 : i32
    %c0_i32_0 = arith.constant 0 : i32
    %c0_i32_1 = arith.constant 0 : i32
    return %c0_i32, %c0_i32_0 : i32, i32
  }
  func.func @transform_7(%arg0: i32) -> (i32, i32) {
    %c0_i32 = arith.constant 0 : i32
    %c0_i32_0 = arith.constant 0 : i32
    return %arg0, %c0_i32 : i32, i32
  }
}

</mosaic_0001>

<llo_original>
// kernel: tpu_custom_call.1
$region0: #{tpu_custom_call.1}
  #allocation0 [shape = 'u32[]', space=smem, size = 0x4, offset = 0x4, fixed_abs, tag = 'smem constant byte address 0x4 - core index']
  #allocation1 [shape = 'u32[144,128]{1,0:T(1,128)}', space=vmem, size = 0x12000, scoped, tag = 'internal scratch']
  %s0 = inlined_call_operand.hbm [shape: f32[32,128], index: 0, kind: input, shape index: {}]
  %s1 = inlined_call_operand.hbm [shape: bf16[128,128], index: 1, kind: input, shape index: {}]
  %s2 = inlined_call_operand.vmem [shape: f32[1,128], index: 2, kind: input, shape index: {}]
  %s3 = inlined_call_operand.hbm [shape: bf16[2,128,128], index: 3, kind: input, shape index: {}]
  %s4 = inlined_call_operand.vmem [shape: f32[2,1,128], index: 4, kind: input, shape index: {}]
  %s5 = inlined_call_operand.hbm [shape: bf16[128,128], index: 5, kind: input, shape index: {}]
  %s6 = inlined_call_operand.vmem [shape: f32[1,128], index: 6, kind: input, shape index: {}]
  %s7 = inlined_call_operand.hbm [shape: f32[32,128], index: 7, kind: output, shape index: {}]
  %s8 = sld [smem:[#allocation0]]
  $region77: #{tpu_custom_call.1} parent=0
    _
  %s10 = ssub.s32 1, %s8
  %s11 = scalar_select 0, %s10, %s8
  $region1: #{tpu_custom_call.1} parent=0
    #allocation2 [shape = 'u8[16384]{0}', space=vmem, size = 0x4000, scoped, tag = 'input window, operand 0']
    #allocation3 [shape = 's32[2]{0}', space=sflag, size = 0x8, scoped, tag = 'scoped memory for tpu_custom_call.1']
    #allocation4 [shape = 's32[2]{0}', space=sflag, size = 0x8, scoped, tag = 'scoped memory for tpu_custom_call.1']
    #allocation5 [shape = 'u8[32768]{0}', space=vmem, size = 0x8000, scoped, tag = 'input window, operand 1, single buffered']
    #allocation6 [shape = 's32[1]{0}', space=sflag, size = 0x4, scoped, tag = 'scoped memory for tpu_custom_call.1']
    #allocation7 [shape = 'u8[65536]{0}', space=vmem, size = 0x10000, scoped, tag = 'input window, operand 3, single buffered']
    #allocation8 [shape = 'u8[32768]{0}', space=vmem, size = 0x8000, scoped, tag = 'input window, operand 5, single buffered']
    #allocation9 [shape = 's32[1]{0}', space=sflag, size = 0x4, scoped, tag = 'scoped memory for tpu_custom_call.1']
    #allocation10 [shape = 'u8[16384]{0}', space=vmem, size = 0x4000, scoped, tag = 'output window, operand 0']
    %12 = vsyncpa [#allocation3], 0
    %s13 = scalar_lea.sflag [#allocation3], 1
    %14 = vsyncpa %s13, 0
    %15 = vsyncpa [#allocation6], 0
    %16 = vsyncpa [#allocation9], 0
    %17 = vsyncpa [#allocation4], 0
    %s18 = scalar_lea.sflag [#allocation4], 1
    %19 = vsyncpa %s18, 0
    loop: start=0, step=1, limit=4
    $region2: #{tpu_custom_call.1} parent=1 // loop_pre_header
      _
    $region3: #{tpu_custom_call.1} parent=1 // loop_header
      %s21 = sphi 0, %s25
      %p22 = scmp.ge.s32.totalorder %s21, 4
      %s31 = sphi 0, %s33
      %s34 = sphi 0, %s31
      %s35 = sphi 0, %s34
      %s51 = sphi 0, %s35
      %s55 = sphi 0, %s55
      %s57 = sphi 0, %s55
      %s58 = sphi 0, %s57
      %s72 = sphi 0, %s58
      %s76 = sphi 0, %s76
      %s78 = sphi 0, %s76
      %s79 = sphi 0, %s78
      %s93 = sphi 0, %s79
      %s97 = sphi 0, %s97
      %s99 = sphi 0, %s97
      %s100 = sphi 0, %s99
      %s114 = sphi 0, %s100
      %s118 = sphi 0, %s118
      %s120 = sphi 0, %s118
      %s121 = sphi 0, %s120
      %s135 = sphi 0, %s121
      %s139 = sphi 0, %s139
      %s141 = sphi 0, %s139
      %s142 = sphi 0, %s141
      %s156 = sphi 0, %s142
      %s160 = sphi 0, %s160
      %s162 = sphi 0, %s160
      %s163 = sphi 0, %s162
      %s177 = sphi 0, %s163
      %s183 = sphi 0, %s185
      %s186 = sphi 0, %s183
      %s187 = sphi 0, %s186
      %s203 = sphi 0, %s187
    $region4: #{tpu_custom_call.1} parent=1 // loop_header_branch
      %24 = sbr.rel (%p22) target = $region8
    $region5: #{tpu_custom_call.1} parent=1 // loop_body
      %s26 = ssub.s32 %s21, 1
      %s27 = ssub.s32 %s21, 2
      %s28 = sadd.s32 %s21, 1
      %s29 = ssub.s32 %s21, %s28
      %p30 = scmp.eq.s32.totalorder %s29, 0
      %s32 = sadd.s32 %s31, 1
      %s33 = scalar_select %p30, %s31, %s32
      %p36 = pneg %p30
      %p37 = scmp.eq.s32.totalorder %s21, 1
      %p38 = por %p36, %p37
      %p39 = scmp.ne.s32.totalorder %s31, %s34
      %p40 = scmp.eq.s32.totalorder %s21, 0
      %p41 = por %p39, %p40
      %p42 = scmp.ne.s32.totalorder %s31, %s34
      %p43 = scmp.eq.s32.totalorder %s26, 1
      %p44 = por %p42, %p43
      %p45 = scmp.ne.s32.totalorder %s34, %s35
      %p46 = scmp.eq.s32.totalorder %s26, 0
      %p47 = por %p45, %p46
      %p48 = scmp.ne.s32.totalorder %s34, %s35
      %p49 = scmp.eq.s32.totalorder %s27, 1
      %p50 = por %p48, %p49
      %p52 = scmp.ne.s32.totalorder %s35, %s51
      %p53 = scmp.eq.s32.totalorder %s27, 0
      %p54 = por %p52, %p53
      %s56 = sadd.s32 %s55, 1
      %p59 = scmp.eq.s32.totalorder %s21, 1
      %p60 = scmp.ne.s32.totalorder %s55, %s57
      %p61 = scmp.eq.s32.totalorder %s21, 0
      %p62 = por %p60, %p61
      %p63 = scmp.ne.s32.totalorder %s55, %s57
      %p64 = scmp.eq.s32.totalorder %s26, 1
      %p65 = por %p63, %p64
      %p66 = scmp.ne.s32.totalorder %s57, %s58
      %p67 = scmp.eq.s32.totalorder %s26, 0
      %p68 = por %p66, %p67
      %p69 = scmp.ne.s32.totalorder %s57, %s58
      %p70 = scmp.eq.s32.totalorder %s27, 1
      %p71 = por %p69, %p70
      %p73 = scmp.ne.s32.totalorder %s58, %s72
      %p74 = scmp.eq.s32.totalorder %s27, 0
      %p75 = por %p73, %p74
      %s77 = sadd.s32 %s76, 1
      %p80 = scmp.eq.s32.totalorder %s21, 1
      %p81 = scmp.ne.s32.totalorder %s76, %s78
      %p82 = scmp.eq.s32.totalorder %s21, 0
      %p83 = por %p81, %p82
      %p84 = scmp.ne.s32.totalorder %s76, %s78
      %p85 = scmp.eq.s32.totalorder %s26, 1
      %p86 = por %p84, %p85
      %p87 = scmp.ne.s32.totalorder %s78, %s79
      %p88 = scmp.eq.s32.totalorder %s26, 0
      %p89 = por %p87, %p88
      %p90 = scmp.ne.s32.totalorder %s78, %s79
      %p91 = scmp.eq.s32.totalorder %s27, 1
      %p92 = por %p90, %p91
      %p94 = scmp.ne.s32.totalorder %s79, %s93
      %p95 = scmp.eq.s32.totalorder %s27, 0
      %p96 = por %p94, %p95
      %s98 = sadd.s32 %s97, 1
      %p101 = scmp.eq.s32.totalorder %s21, 1
      %p102 = scmp.ne.s32.totalorder %s97, %s99
      %p103 = scmp.eq.s32.totalorder %s21, 0
      %p104 = por %p102, %p103
      %p105 = scmp.ne.s32.totalorder %s97, %s99
      %p106 = scmp.eq.s32.totalorder %s26, 1
      %p107 = por %p105, %p106
      %p108 = scmp.ne.s32.totalorder %s99, %s100
      %p109 = scmp.eq.s32.totalorder %s26, 0
      %p110 = por %p108, %p109
      %p111 = scmp.ne.s32.totalorder %s99, %s100
      %p112 = scmp.eq.s32.totalorder %s27, 1
      %p113 = por %p111, %p112
      %p115 = scmp.ne.s32.totalorder %s100, %s114
      %p116 = scmp.eq.s32.totalorder %s27, 0
      %p117 = por %p115, %p116
      %s119 = sadd.s32 %s118, 1
      %p122 = scmp.eq.s32.totalorder %s21, 1
      %p123 = scmp.ne.s32.totalorder %s118, %s120
      %p124 = scmp.eq.s32.totalorder %s21, 0
      %p125 = por %p123, %p124
      %p126 = scmp.ne.s32.totalorder %s118, %s120
      %p127 = scmp.eq.s32.totalorder %s26, 1
      %p128 = por %p126, %p127
      %p129 = scmp.ne.s32.totalorder %s120, %s121
      %p130 = scmp.eq.s32.totalorder %s26, 0
      %p131 = por %p129, %p130
      %p132 = scmp.ne.s32.totalorder %s120, %s121
      %p133 = scmp.eq.s32.totalorder %s27, 1
      %p134 = por %p132, %p133
      %p136 = scmp.ne.s32.totalorder %s121, %s135
      %p137 = scmp.eq.s32.totalorder %s27, 0
      %p138 = por %p136, %p137
      %s140 = sadd.s32 %s139, 1
      %p143 = scmp.eq.s32.totalorder %s21, 1
      %p144 = scmp.ne.s32.totalorder %s139, %s141
      %p145 = scmp.eq.s32.totalorder %s21, 0
      %p146 = por %p144, %p145
      %p147 = scmp.ne.s32.totalorder %s139, %s141
      %p148 = scmp.eq.s32.totalorder %s26, 1
      %p149 = por %p147, %p148
      %p150 = scmp.ne.s32.totalorder %s141, %s142
      %p151 = scmp.eq.s32.totalorder %s26, 0
      %p152 = por %p150, %p151
      %p153 = scmp.ne.s32.totalorder %s141, %s142
      %p154 = scmp.eq.s32.totalorder %s27, 1
      %p155 = por %p153, %p154
      %p157 = scmp.ne.s32.totalorder %s142, %s156
      %p158 = scmp.eq.s32.totalorder %s27, 0
      %p159 = por %p157, %p158
      %s161 = sadd.s32 %s160, 1
      %p164 = scmp.eq.s32.totalorder %s21, 1
      %p165 = scmp.ne.s32.totalorder %s160, %s162
      %p166 = scmp.eq.s32.totalorder %s21, 0
      %p167 = por %p165, %p166
      %p168 = scmp.ne.s32.totalorder %s160, %s162
      %p169 = scmp.eq.s32.totalorder %s26, 1
      %p170 = por %p168, %p169
      %p171 = scmp.ne.s32.totalorder %s162, %s163
      %p172 = scmp.eq.s32.totalorder %s26, 0
      %p173 = por %p171, %p172
      %p174 = scmp.ne.s32.totalorder %s162, %s163
      %p175 = scmp.eq.s32.totalorder %s27, 1
      %p176 = por %p174, %p175
      %p178 = scmp.ne.s32.totalorder %s163, %s177
      %p179 = scmp.eq.s32.totalorder %s27, 0
      %p180 = por %p178, %p179
      %s181 = ssub.s32 %s21, %s28
      %p182 = scmp.eq.s32.totalorder %s181, 0
      %s184 = sadd.s32 %s183, 1
      %s185 = scalar_select %p182, %s183, %s184
      %p188 = pneg %p182
      %p189 = scmp.eq.s32.totalorder %s21, 1
      %p190 = por %p188, %p189
      %p191 = scmp.ne.s32.totalorder %s183, %s186
      %p192 = scmp.eq.s32.totalorder %s21, 0
      %p193 = por %p191, %p192
      %p194 = scmp.ne.s32.totalorder %s183, %s186
      %p195 = scmp.eq.s32.totalorder %s26, 1
      %p196 = por %p194, %p195
      %p197 = scmp.ne.s32.totalorder %s186, %s187
      %p198 = scmp.eq.s32.totalorder %s26, 0
      %p199 = por %p197, %p198
      %p200 = scmp.ne.s32.totalorder %s186, %s187
      %p201 = scmp.eq.s32.totalorder %s27, 1
      %p202 = por %p200, %p201
      %p204 = scmp.ne.s32.totalorder %s187, %s203
      %p205 = scmp.eq.s32.totalorder %s27, 0
      %p206 = por %p204, %p205
      %p207 = scmp.le.s32.totalorder 1, %s21
      %p208 = scmp.lt.s32.totalorder %s21, 3
      %p209 = pnand %p207, %p208
      %p210 = pneg %p209
      // Predicated region
      $region9: #{tpu_custom_call.1} parent=5 // pred_check
        _
      $region10: #{tpu_custom_call.1} parent=5 // pred_check_branch
        %212 = sbr.rel (%p209) target = $region12
      $region11: #{tpu_custom_call.1} parent=5 // pred_region
        %s213 = ssub.s32 %s21, 1
        // Predicated region
        $region13: #{tpu_custom_call.1} parent=11 // pred_check
          %p214 = pneg %p68
        $region14: #{tpu_custom_call.1} parent=11 // pred_check_branch
          %216 = sbr.rel (%p214) target = $region16
        $region15: #{tpu_custom_call.1} parent=11 // pred_region
          %s218 = ssub.s32 1024, 1024
          %219 = vsyncadd [#allocation6], %s218
          %s220 = sshll.u32 [#allocation5], 4
          %s221 = int_to_ptr.vmem [resolvable:$true] %s220
          %226 = dma.hbm_to_vmem [thread:$0]  %s1, 1024, %s221, [#allocation6], 64, 64, 4
        $region16: #{tpu_custom_call.1} parent=11 // pred_fallthru
          _
        // Predicated region
        $region17: #{tpu_custom_call.1} parent=11 // pred_check
          %p227 = pneg %p89
        $region18: #{tpu_custom_call.1} parent=11 // pred_check_branch
          %229 = sbr.rel (%p227) target = $region20
        $region19: #{tpu_custom_call.1} parent=11 // pred_region
          _
        $region20: #{tpu_custom_call.1} parent=11 // pred_fallthru
          _
        // Predicated region
        $region21: #{tpu_custom_call.1} parent=11 // pred_check
          %p230 = pneg %p110
        $region22: #{tpu_custom_call.1} parent=11 // pred_check_branch
          %232 = sbr.rel (%p230) target = $region24
        $region23: #{tpu_custom_call.1} parent=11 // pred_region
          %s234 = ssub.s32 2048, 2048
          %235 = vsyncadd [#allocation6], %s234
          %s236 = sshll.u32 [#allocation7], 4
          %s237 = int_to_ptr.vmem [resolvable:$true] %s236
          %242 = dma.hbm_to_vmem [thread:$0]  %s3, 2048, %s237, [#allocation6], 64, 64, 4
        $region24: #{tpu_custom_call.1} parent=11 // pred_fallthru
          _
        // Predicated region
        $region25: #{tpu_custom_call.1} parent=11 // pred_check
          %p243 = pneg %p131
        $region26: #{tpu_custom_call.1} parent=11 // pred_check_branch
          %245 = sbr.rel (%p243) target = $region28
        $region27: #{tpu_custom_call.1} parent=11 // pred_region
          _
        $region28: #{tpu_custom_call.1} parent=11 // pred_fallthru
          _
        // Predicated region
        $region29: #{tpu_custom_call.1} parent=11 // pred_check
          %p246 = pneg %p152
        $region30: #{tpu_custom_call.1} parent=11 // pred_check_branch
          %248 = sbr.rel (%p246) target = $region32
        $region31: #{tpu_custom_call.1} parent=11 // pred_region
          %s250 = ssub.s32 1024, 1024
          %251 = vsyncadd [#allocation9], %s250
          %s252 = sshll.u32 [#allocation8], 4
          %s253 = int_to_ptr.vmem [resolvable:$true] %s252
          %258 = dma.hbm_to_vmem [thread:$0]  %s5, 1024, %s253, [#allocation9], 64, 64, 4
        $region32: #{tpu_custom_call.1} parent=11 // pred_fallthru
          _
        // Predicated region
        $region33: #{tpu_custom_call.1} parent=11 // pred_check
          %p259 = pneg %p173
        $region34: #{tpu_custom_call.1} parent=11 // pred_check_branch
          %261 = sbr.rel (%p259) target = $region36
        $region35: #{tpu_custom_call.1} parent=11 // pred_region
          _
        $region36: #{tpu_custom_call.1} parent=11 // pred_fallthru
          _
      $region12: #{tpu_custom_call.1} parent=5 // pred_fallthru
        _
      %p262 = scmp.lt.s32.totalorder %s21, 2
      // Predicated region
      $region37: #{tpu_custom_call.1} parent=5 // pred_check
        %p263 = pneg %p262
      $region38: #{tpu_custom_call.1} parent=5 // pred_check_branch
        %265 = sbr.rel (%p263) target = $region40
      $region39: #{tpu_custom_call.1} parent=5 // pred_region
        // Predicated region
        $region41: #{tpu_custom_call.1} parent=39 // pred_check
          %p266 = pneg %p41
        $region42: #{tpu_custom_call.1} parent=39 // pred_check_branch
          %268 = sbr.rel (%p266) target = $region44
        $region43: #{tpu_custom_call.1} parent=39 // pred_region
          %s269 = sand.u32 %s31, 1
          %s270 = scalar_lea.sflag [#allocation3], %s269
          %s271 = sand.u32 %s31, 1
          %s272 = smul.addr %s271, 16
          %s273 = scalar_lea.vmem [#allocation2], %s272
          %s274 = smul.u32 2, %s21
          %s276 = ssub.s32 256, 256
          %277 = vsyncadd %s270, %s276
          %s278 = smul.addr %s274, 128
          %s279 = scalar_lea.hbm %s0, %s278
          %s280 = sshll.u32 %s273, 4
          %s281 = int_to_ptr.vmem [resolvable:$true] %s280
          %286 = dma.hbm_to_vmem [thread:$0]  %s279, 256, %s281, %s270, 128, 128, 8
        $region44: #{tpu_custom_call.1} parent=39 // pred_fallthru
          _
      $region40: #{tpu_custom_call.1} parent=5 // pred_fallthru
        _
      %p287 = scmp.le.s32.totalorder 1, %s21
      %p288 = scmp.lt.s32.totalorder %s21, 3
      %p289 = pnand %p287, %p288
      %p290 = pneg %p289
      // Predicated region
      $region45: #{tpu_custom_call.1} parent=5 // pred_check
        _
      $region46: #{tpu_custom_call.1} parent=5 // pred_check_branch
        %292 = sbr.rel (%p289) target = $region48
      $region47: #{tpu_custom_call.1} parent=5 // pred_region
        %s293 = ssub.s32 %s21, 1
        %s294 = sand.u32 %s34, 1
        %s295 = scalar_lea.sflag [#allocation3], %s294
        %s296 = sand.u32 %s34, 1
        %s297 = smul.addr %s296, 16
        %s298 = scalar_lea.vmem [#allocation2], %s297
        // Predicated region
        $region49: #{tpu_custom_call.1} parent=47 // pred_check
          %p299 = pneg %p47
        $region50: #{tpu_custom_call.1} parent=47 // pred_check_branch
          %301 = sbr.rel (%p299) target = $region52
        $region51: #{tpu_custom_call.1} parent=47 // pred_region
          %302 = dma.done %s295, 256
        $region52: #{tpu_custom_call.1} parent=47 // pred_fallthru
          _
        // Predicated region
        $region53: #{tpu_custom_call.1} parent=47 // pred_check
          %p303 = pneg %p68
        $region54: #{tpu_custom_call.1} parent=47 // pred_check_branch
          %305 = sbr.rel (%p303) target = $region56
        $region55: #{tpu_custom_call.1} parent=47 // pred_region
          %306 = dma.done [#allocation6], 1024
        $region56: #{tpu_custom_call.1} parent=47 // pred_fallthru
          _
        // Predicated region
        $region57: #{tpu_custom_call.1} parent=47 // pred_check
          %p307 = pneg %p110
        $region58: #{tpu_custom_call.1} parent=47 // pred_check_branch
          %309 = sbr.rel (%p307) target = $region60
        $region59: #{tpu_custom_call.1} parent=47 // pred_region
          %310 = dma.done [#allocation6], 2048
        $region60: #{tpu_custom_call.1} parent=47 // pred_fallthru
          _
        // Predicated region
        $region61: #{tpu_custom_call.1} parent=47 // pred_check
          %p311 = pneg %p152
        $region62: #{tpu_custom_call.1} parent=47 // pred_check_branch
          %313 = sbr.rel (%p311) target = $region64
        $region63: #{tpu_custom_call.1} parent=47 // pred_region
          %314 = dma.done [#allocation9], 1024
        $region64: #{tpu_custom_call.1} parent=47 // pred_fallthru
          _
        %s315 = sand.u32 %s34, 1
        %s316 = scalar_lea.sflag [#allocation3], %s315
        %s317 = sand.u32 %s34, 1
        %s318 = smul.addr %s317, 16
        %s319 = scalar_lea.vmem [#allocation2], %s318
        %p320 = pneg %p47
        %p321 = pneg %p44
        %p322 = pneg %p68
        %p323 = pneg %p65
        %p324 = pneg %p89
        %p325 = pneg %p86
        %p326 = pneg %p110
        %p327 = pneg %p107
        %p328 = pneg %p131
        %p329 = pneg %p128
        %p330 = pneg %p152
        %p331 = pneg %p149
        %p332 = pneg %p173
        %p333 = pneg %p170
        %p334 = pneg %p199
        %p335 = pneg %p196
        %s336 = sand.u32 %s186, 1
        %s337 = scalar_lea.sflag [#allocation4], %s336
        %s338 = sand.u32 %s186, 1
        %s339 = smul.addr %s338, 16
        %s340 = scalar_lea.vmem [#allocation10], %s339
        %s341 = smul.u32 2, %s26
        %s342 = smul.u32 2, %s26
        %v344 = vld [vmem:[%s298] sm:$0xff]
        %v345 = vld [vmem:[%s298 + $0x8] sm:$0xff]
        %v346 = vpack.c.bf16 %v345, %v344
        %v347 = vld [vmem:[#allocation5] sm:$0xf]
        %v348 = vld [vmem:[#allocation5 + $0x4] sm:$0xf]
        %v349 = vld [vmem:[#allocation5 + $0x8] sm:$0xf]
        %v350 = vld [vmem:[#allocation5 + $0xc] sm:$0xf]
        %v351 = vld [vmem:[#allocation5 + $0x10] sm:$0xf]
        %v352 = vld [vmem:[#allocation5 + $0x14] sm:$0xf]
        %v353 = vld [vmem:[#allocation5 + $0x18] sm:$0xf]
        %v354 = vld [vmem:[#allocation5 + $0x1c] sm:$0xf]
        %v355 = vld [vmem:[#allocation5 + $0x20] sm:$0xf]
        %v356 = vld [vmem:[#allocation5 + $0x24] sm:$0xf]
        %v357 = vld [vmem:[#allocation5 + $0x28] sm:$0xf]
        %v358 = vld [vmem:[#allocation5 + $0x2c] sm:$0xf]
        %v359 = vld [vmem:[#allocation5 + $0x30] sm:$0xf]
        %v360 = vld [vmem:[#allocation5 + $0x34] sm:$0xf]
        %v361 = vld [vmem:[#allocation5 + $0x38] sm:$0xf]
        %v362 = vld [vmem:[#allocation5 + $0x3c] sm:$0xf]
        %v363 = vld [vmem:[%s2] sm:$0x1]
        %v365 = vlaneseq
        %v366 = vshrl.u32 %v365, 7
        %v367 = vsub.s32 0, %v366
        %v368 = vrot.slane %v363, %v367
        %v386 = vunpack.c.l.b16 %v347
        %v387 = vunpack.c.l.b16 %v348
        %v388 = vunpack.c.l.b16 %v349
        %v389 = vunpack.c.l.b16 %v350
        %v390 = vunpack.c.l.b16 %v351
        %v391 = vunpack.c.l.b16 %v352
        %v392 = vunpack.c.l.b16 %v353
        %v393 = vunpack.c.l.b16 %v354
        %v394 = vunpack.c.l.b16 %v355
        %v395 = vunpack.c.l.b16 %v356
        %v396 = vunpack.c.l.b16 %v357
        %v397 = vunpack.c.l.b16 %v358
        %v398 = vunpack.c.l.b16 %v359
        %v399 = vunpack.c.l.b16 %v360
        %v400 = vunpack.c.l.b16 %v361
        %v401 = vunpack.c.l.b16 %v362
        %v402 = vpack.c.b16 %v387, %v386
        %v403 = vpack.c.b16 %v389, %v388
        %v404 = vpack.c.b16 %v391, %v390
        %v405 = vpack.c.b16 %v393, %v392
        %v406 = vpack.c.b16 %v395, %v394
        %v407 = vpack.c.b16 %v397, %v396
        %v408 = vpack.c.b16 %v399, %v398
        %v409 = vpack.c.b16 %v401, %v400
        %418 = vmatprep.subr.bf16.mxu0 0
        %419 = vmatpush1.bf16.msra.mxu0 %v402
        %420 = vmatprep.subr.bf16.mxu0 0
        %421 = vmatpush1.bf16.msra.mxu0 %v403
        %422 = vmatprep.subr.bf16.mxu0 0
        %423 = vmatpush1.bf16.msra.mxu0 %v404
        %424 = vmatprep.subr.bf16.mxu0 0
        %425 = vmatpush1.bf16.msra.mxu0 %v405
        %426 = vmatprep.subr.bf16.mxu0 0
        %427 = vmatpush1.bf16.msra.mxu0 %v406
        %428 = vmatprep.subr.bf16.mxu0 0
        %429 = vmatpush1.bf16.msra.mxu0 %v407
        %430 = vmatprep.subr.bf16.mxu0 0
        %431 = vmatpush1.bf16.msra.mxu0 %v408
        %432 = vmatprep.subr.bf16.mxu0 0
        %433 = vmatpush1.bf16.msra.mxu0 %v409
        %434 = vmatprep.subr.bf16.mxu0 0
        %435 = vmatpush1.bf16.msra.mxu0 0
        %436 = vmatprep.subr.bf16.mxu0 0
        %437 = vmatpush1.bf16.msra.mxu0 0
        %438 = vmatprep.subr.bf16.mxu0 0
        %439 = vmatpush1.bf16.msra.mxu0 0
        %440 = vmatprep.subr.bf16.mxu0 0
        %441 = vmatpush1.bf16.msra.mxu0 0
        %442 = vmatprep.subr.bf16.mxu0 0
        %443 = vmatpush1.bf16.msra.mxu0 0
        %444 = vmatprep.subr.bf16.mxu0 0
        %445 = vmatpush1.bf16.msra.mxu0 0
        %446 = vmatprep.subr.bf16.mxu0 0
        %447 = vmatpush1.bf16.msra.mxu0 0
        %448 = vmatprep.subr.bf16.mxu0 0
        %449 = vmatpush1.bf16.msra.mxu0 0
        %450 = vmatprep.mubr.bf16.mxu0 0
        %451 = vmatmul.mubr.bf16.gmra.mrb[0].mxu0 %v346
        %v452 = vpop.f32.mrb[0].mxu0
        %v453 = vadd.f32 %v368, %v452
        %v454 = vpop.f32.mrb[0].mxu0
        %v455 = vpop.f32.mrb[0].mxu0
        %v456 = vadd.f32 %v368, %v455
        %v457 = vpop.f32.mrb[0].mxu0
        %458 = vdwg.mxu0
        %v459 = vmul.f32 %v453, 0.5
        %v460 = vmul.f32 %v456, 0.5
        %v461 = vmul.f32 %v453, 0.70710677
        %v462 = vmul.f32 %v456, 0.70710677
        %v463 = verf.f32.pop %v461
        %v464 = verf.f32.pop %v462
        %v465 = vadd.f32 %v463, 1.0
        %v466 = vadd.f32 %v464, 1.0
        %v467 = vmul.f32 %v459, %v465
        %v468 = vmul.f32 %v460, %v466
        %v469 = vpack.c.bf16 %v468, %v467
        %v470 = vld [vmem:[#allocation7] sm:$0xf]
        %v471 = vld [vmem:[#allocation7 + $0x4] sm:$0xf]
        %v472 = vld [vmem:[#allocation7 + $0x8] sm:$0xf]
        %v473 = vld [vmem:[#allocation7 + $0xc] sm:$0xf]
        %v474 = vld [vmem:[#allocation7 + $0x10] sm:$0xf]
        %v475 = vld [vmem:[#allocation7 + $0x14] sm:$0xf]
        %v476 = vld [vmem:[#allocation7 + $0x18] sm:$0xf]
        %v477 = vld [vmem:[#allocation7 + $0x1c] sm:$0xf]
        %v478 = vld [vmem:[#allocation7 + $0x20] sm:$0xf]
        %v479 = vld [vmem:[#allocation7 + $0x24] sm:$0xf]
        %v480 = vld [vmem:[#allocation7 + $0x28] sm:$0xf]
        %v481 = vld [vmem:[#allocation7 + $0x2c] sm:$0xf]
        %v482 = vld [vmem:[#allocation7 + $0x30] sm:$0xf]
        %v483 = vld [vmem:[#allocation7 + $0x34] sm:$0xf]
        %v484 = vld [vmem:[#allocation7 + $0x38] sm:$0xf]
        %v485 = vld [vmem:[#allocation7 + $0x3c] sm:$0xf]
        %v486 = vld [vmem:[%s4] sm:$0x1]
        %v488 = vlaneseq
        %v489 = vshrl.u32 %v488, 7
        %v490 = vsub.s32 0, %v489
        %v491 = vrot.slane %v486, %v490
        %v509 = vunpack.c.l.b16 %v470
        %v510 = vunpack.c.l.b16 %v471
        %v511 = vunpack.c.l.b16 %v472
        %v512 = vunpack.c.l.b16 %v473
        %v513 = vunpack.c.l.b16 %v474
        %v514 = vunpack.c.l.b16 %v475
        %v515 = vunpack.c.l.b16 %v476
        %v516 = vunpack.c.l.b16 %v477
        %v517 = vunpack.c.l.b16 %v478
        %v518 = vunpack.c.l.b16 %v479
        %v519 = vunpack.c.l.b16 %v480
        %v520 = vunpack.c.l.b16 %v481
        %v521 = vunpack.c.l.b16 %v482
        %v522 = vunpack.c.l.b16 %v483
        %v523 = vunpack.c.l.b16 %v484
        %v524 = vunpack.c.l.b16 %v485
        %v525 = vpack.c.b16 %v510, %v509
        %v526 = vpack.c.b16 %v512, %v511
        %v527 = vpack.c.b16 %v514, %v513
        %v528 = vpack.c.b16 %v516, %v515
        %v529 = vpack.c.b16 %v518, %v517
        %v530 = vpack.c.b16 %v520, %v519
        %v531 = vpack.c.b16 %v522, %v521
        %v532 = vpack.c.b16 %v524, %v523
        %541 = vmatprep.subr.bf16.mxu0 0
        %542 = vmatpush1.bf16.msra.mxu0 %v525
        %543 = vmatprep.subr.bf16.mxu0 0
        %544 = vmatpush1.bf16.msra.mxu0 %v526
        %545 = vmatprep.subr.bf16.mxu0 0
        %546 = vmatpush1.bf16.msra.mxu0 %v527
        %547 = vmatprep.subr.bf16.mxu0 0
        %548 = vmatpush1.bf16.msra.mxu0 %v528
        %549 = vmatprep.subr.bf16.mxu0 0
        %550 = vmatpush1.bf16.msra.mxu0 %v529
        %551 = vmatprep.subr.bf16.mxu0 0
        %552 = vmatpush1.bf16.msra.mxu0 %v530
        %553 = vmatprep.subr.bf16.mxu0 0
        %554 = vmatpush1.bf16.msra.mxu0 %v531
        %555 = vmatprep.subr.bf16.mxu0 0
        %556 = vmatpush1.bf16.msra.mxu0 %v532
        %557 = vmatprep.subr.bf16.mxu0 0
        %558 = vmatpush1.bf16.msra.mxu0 0
        %559 = vmatprep.subr.bf16.mxu0 0
        %560 = vmatpush1.bf16.msra.mxu0 0
        %561 = vmatprep.subr.bf16.mxu0 0
        %562 = vmatpush1.bf16.msra.mxu0 0
        %563 = vmatprep.subr.bf16.mxu0 0
        %564 = vmatpush1.bf16.msra.mxu0 0
        %565 = vmatprep.subr.bf16.mxu0 0
        %566 = vmatpush1.bf16.msra.mxu0 0
        %567 = vmatprep.subr.bf16.mxu0 0
        %568 = vmatpush1.bf16.msra.mxu0 0
        %569 = vmatprep.subr.bf16.mxu0 0
        %570 = vmatpush1.bf16.msra.mxu0 0
        %571 = vmatprep.subr.bf16.mxu0 0
        %572 = vmatpush1.bf16.msra.mxu0 0
        %573 = vmatprep.mubr.bf16.mxu0 0
        %574 = vmatmul.mubr.bf16.gmra.mrb[0].mxu0 %v469
        %v575 = vpop.f32.mrb[0].mxu0
        %v576 = vadd.f32 %v491, %v575
        %v577 = vpop.f32.mrb[0].mxu0
        %v578 = vpop.f32.mrb[0].mxu0
        %v579 = vadd.f32 %v491, %v578
        %v580 = vpop.f32.mrb[0].mxu0
        %581 = vdwg.mxu0
        %v582 = vmul.f32 %v576, 0.5
        %v583 = vmul.f32 %v579, 0.5
        %v584 = vmul.f32 %v576, 0.70710677
        %v585 = vmul.f32 %v579, 0.70710677
        %v586 = verf.f32.pop %v584
        %v587 = verf.f32.pop %v585
        %v588 = vadd.f32 %v586, 1.0
        %v589 = vadd.f32 %v587, 1.0
        %v590 = vmul.f32 %v582, %v588
        %v591 = vmul.f32 %v583, %v589
        %v592 = vadd.f32 %v590, %v467
        %v593 = vadd.f32 %v591, %v468
        %v594 = vpack.c.bf16 %v593, %v592
        %s595 = scalar_lea.vmem [#allocation7], 64
        %v596 = vld [vmem:[%s595] sm:$0xf]
        %v597 = vld [vmem:[%s595 + $0x4] sm:$0xf]
        %v598 = vld [vmem:[%s595 + $0x8] sm:$0xf]
        %v599 = vld [vmem:[%s595 + $0xc] sm:$0xf]
        %v600 = vld [vmem:[%s595 + $0x10] sm:$0xf]
        %v601 = vld [vmem:[%s595 + $0x14] sm:$0xf]
        %v602 = vld [vmem:[%s595 + $0x18] sm:$0xf]
        %v603 = vld [vmem:[%s595 + $0x1c] sm:$0xf]
        %v604 = vld [vmem:[%s595 + $0x20] sm:$0xf]
        %v605 = vld [vmem:[%s595 + $0x24] sm:$0xf]
        %v606 = vld [vmem:[%s595 + $0x28] sm:$0xf]
        %v607 = vld [vmem:[%s595 + $0x2c] sm:$0xf]
        %v608 = vld [vmem:[%s595 + $0x30] sm:$0xf]
        %v609 = vld [vmem:[%s595 + $0x34] sm:$0xf]
        %v610 = vld [vmem:[%s595 + $0x38] sm:$0xf]
        %v611 = vld [vmem:[%s595 + $0x3c] sm:$0xf]
        %s612 = scalar_lea.vmem %s4, 1
        %v613 = vld [vmem:[%s612] sm:$0x1]
        %v615 = vlaneseq
        %v616 = vshrl.u32 %v615, 7
        %v617 = vsub.s32 0, %v616
        %v618 = vrot.slane %v613, %v617
        %v636 = vunpack.c.l.b16 %v596
        %v637 = vunpack.c.l.b16 %v597
        %v638 = vunpack.c.l.b16 %v598
        %v639 = vunpack.c.l.b16 %v599
        %v640 = vunpack.c.l.b16 %v600
        %v641 = vunpack.c.l.b16 %v601
        %v642 = vunpack.c.l.b16 %v602
        %v643 = vunpack.c.l.b16 %v603
        %v644 = vunpack.c.l.b16 %v604
        %v645 = vunpack.c.l.b16 %v605
        %v646 = vunpack.c.l.b16 %v606
        %v647 = vunpack.c.l.b16 %v607
        %v648 = vunpack.c.l.b16 %v608
        %v649 = vunpack.c.l.b16 %v609
        %v650 = vunpack.c.l.b16 %v610
        %v651 = vunpack.c.l.b16 %v611
        %v652 = vpack.c.b16 %v637, %v636
        %v653 = vpack.c.b16 %v639, %v638
        %v654 = vpack.c.b16 %v641, %v640
        %v655 = vpack.c.b16 %v643, %v642
        %v656 = vpack.c.b16 %v645, %v644
        %v657 = vpack.c.b16 %v647, %v646
        %v658 = vpack.c.b16 %v649, %v648
        %v659 = vpack.c.b16 %v651, %v650
        %668 = vmatprep.subr.bf16.mxu0 0
        %669 = vmatpush1.bf16.msra.mxu0 %v652
        %670 = vmatprep.subr.bf16.mxu0 0
        %671 = vmatpush1.bf16.msra.mxu0 %v653
        %672 = vmatprep.subr.bf16.mxu0 0
        %673 = vmatpush1.bf16.msra.mxu0 %v654
        %674 = vmatprep.subr.bf16.mxu0 0
        %675 = vmatpush1.bf16.msra.mxu0 %v655
        %676 = vmatprep.subr.bf16.mxu0 0
        %677 = vmatpush1.bf16.msra.mxu0 %v656
        %678 = vmatprep.subr.bf16.mxu0 0
        %679 = vmatpush1.bf16.msra.mxu0 %v657
        %680 = vmatprep.subr.bf16.mxu0 0
        %681 = vmatpush1.bf16.msra.mxu0 %v658
        %682 = vmatprep.subr.bf16.mxu0 0
        %683 = vmatpush1.bf16.msra.mxu0 %v659
        %684 = vmatprep.subr.bf16.mxu0 0
        %685 = vmatpush1.bf16.msra.mxu0 0
        %686 = vmatprep.subr.bf16.mxu0 0
        %687 = vmatpush1.bf16.msra.mxu0 0
        %688 = vmatprep.subr.bf16.mxu0 0
        %689 = vmatpush1.bf16.msra.mxu0 0
        %690 = vmatprep.subr.bf16.mxu0 0
        %691 = vmatpush1.bf16.msra.mxu0 0
        %692 = vmatprep.subr.bf16.mxu0 0
        %693 = vmatpush1.bf16.msra.mxu0 0
        %694 = vmatprep.subr.bf16.mxu0 0
        %695 = vmatpush1.bf16.msra.mxu0 0
        %696 = vmatprep.subr.bf16.mxu0 0
        %697 = vmatpush1.bf16.msra.mxu0 0
        %698 = vmatprep.subr.bf16.mxu0 0
        %699 = vmatpush1.bf16.msra.mxu0 0
        %700 = vmatprep.mubr.bf16.mxu0 0
        %701 = vmatmul.mubr.bf16.gmra.mrb[0].mxu0 %v594
        %v702 = vpop.f32.mrb[0].mxu0
        %v703 = vadd.f32 %v618, %v702
        %v704 = vpop.f32.mrb[0].mxu0
        %v705 = vpop.f32.mrb[0].mxu0
        %v706 = vadd.f32 %v618, %v705
        %v707 = vpop.f32.mrb[0].mxu0
        %708 = vdwg.mxu0
        %v709 = vmul.f32 %v703, 0.5
        %v710 = vmul.f32 %v706, 0.5
        %v711 = vmul.f32 %v703, 0.70710677
        %v712 = vmul.f32 %v706, 0.70710677
        %v713 = verf.f32.pop %v711
        %v714 = verf.f32.pop %v712
        %v715 = vadd.f32 %v713, 1.0
        %v716 = vadd.f32 %v714, 1.0
        %v717 = vmul.f32 %v709, %v715
        %v718 = vmul.f32 %v710, %v716
        %v719 = vadd.f32 %v717, %v592
        %v720 = vadd.f32 %v718, %v593
        %v721 = vpack.c.bf16 %v720, %v719
        %v722 = vld [vmem:[#allocation8] sm:$0xf]
        %v723 = vld [vmem:[#allocation8 + $0x4] sm:$0xf]
        %v724 = vld [vmem:[#allocation8 + $0x8] sm:$0xf]
        %v725 = vld [vmem:[#allocation8 + $0xc] sm:$0xf]
        %v726 = vld [vmem:[#allocation8 + $0x10] sm:$0xf]
        %v727 = vld [vmem:[#allocation8 + $0x14] sm:$0xf]
        %v728 = vld [vmem:[#allocation8 + $0x18] sm:$0xf]
        %v729 = vld [vmem:[#allocation8 + $0x1c] sm:$0xf]
        %v730 = vld [vmem:[#allocation8 + $0x20] sm:$0xf]
        %v731 = vld [vmem:[#allocation8 + $0x24] sm:$0xf]
        %v732 = vld [vmem:[#allocation8 + $0x28] sm:$0xf]
        %v733 = vld [vmem:[#allocation8 + $0x2c] sm:$0xf]
        %v734 = vld [vmem:[#allocation8 + $0x30] sm:$0xf]
        %v735 = vld [vmem:[#allocation8 + $0x34] sm:$0xf]
        %v736 = vld [vmem:[#allocation8 + $0x38] sm:$0xf]
        %v737 = vld [vmem:[#allocation8 + $0x3c] sm:$0xf]
        %v738 = vld [vmem:[%s6] sm:$0x1]
        %v740 = vlaneseq
        %v741 = vshrl.u32 %v740, 7
        %v742 = vsub.s32 0, %v741
        %v743 = vrot.slane %v738, %v742
        %v761 = vunpack.c.l.b16 %v722
        %v762 = vunpack.c.l.b16 %v723
        %v763 = vunpack.c.l.b16 %v724
        %v764 = vunpack.c.l.b16 %v725
        %v765 = vunpack.c.l.b16 %v726
        %v766 = vunpack.c.l.b16 %v727
        %v767 = vunpack.c.l.b16 %v728
        %v768 = vunpack.c.l.b16 %v729
        %v769 = vunpack.c.l.b16 %v730
        %v770 = vunpack.c.l.b16 %v731
        %v771 = vunpack.c.l.b16 %v732
        %v772 = vunpack.c.l.b16 %v733
        %v773 = vunpack.c.l.b16 %v734
        %v774 = vunpack.c.l.b16 %v735
        %v775 = vunpack.c.l.b16 %v736
        %v776 = vunpack.c.l.b16 %v737
        %v777 = vpack.c.b16 %v762, %v761
        %v778 = vpack.c.b16 %v764, %v763
        %v779 = vpack.c.b16 %v766, %v765
        %v780 = vpack.c.b16 %v768, %v767
        %v781 = vpack.c.b16 %v770, %v769
        %v782 = vpack.c.b16 %v772, %v771
        %v783 = vpack.c.b16 %v774, %v773
        %v784 = vpack.c.b16 %v776, %v775
        %793 = vmatprep.subr.bf16.mxu0 0
        %794 = vmatpush1.bf16.msra.mxu0 %v777
        %795 = vmatprep.subr.bf16.mxu0 0
        %796 = vmatpush1.bf16.msra.mxu0 %v778
        %797 = vmatprep.subr.bf16.mxu0 0
        %798 = vmatpush1.bf16.msra.mxu0 %v779
        %799 = vmatprep.subr.bf16.mxu0 0
        %800 = vmatpush1.bf16.msra.mxu0 %v780
        %801 = vmatprep.subr.bf16.mxu0 0
        %802 = vmatpush1.bf16.msra.mxu0 %v781
        %803 = vmatprep.subr.bf16.mxu0 0
        %804 = vmatpush1.bf16.msra.mxu0 %v782
        %805 = vmatprep.subr.bf16.mxu0 0
        %806 = vmatpush1.bf16.msra.mxu0 %v783
        %807 = vmatprep.subr.bf16.mxu0 0
        %808 = vmatpush1.bf16.msra.mxu0 %v784
        %809 = vmatprep.subr.bf16.mxu0 0
        %810 = vmatpush1.bf16.msra.mxu0 0
        %811 = vmatprep.subr.bf16.mxu0 0
        %812 = vmatpush1.bf16.msra.mxu0 0
        %813 = vmatprep.subr.bf16.mxu0 0
        %814 = vmatpush1.bf16.msra.mxu0 0
        %815 = vmatprep.subr.bf16.mxu0 0
        %816 = vmatpush1.bf16.msra.mxu0 0
        %817 = vmatprep.subr.bf16.mxu0 0
        %818 = vmatpush1.bf16.msra.mxu0 0
        %819 = vmatprep.subr.bf16.mxu0 0
        %820 = vmatpush1.bf16.msra.mxu0 0
        %821 = vmatprep.subr.bf16.mxu0 0
        %822 = vmatpush1.bf16.msra.mxu0 0
        %823 = vmatprep.subr.bf16.mxu0 0
        %824 = vmatpush1.bf16.msra.mxu0 0
        %825 = vmatprep.mubr.bf16.mxu0 0
        %826 = vmatmul.mubr.bf16.gmra.mrb[0].mxu0 %v721
        %v827 = vpop.f32.mrb[0].mxu0
        %v828 = vadd.f32 %v743, %v827
        %v829 = vpop.f32.mrb[0].mxu0
        %v830 = vpop.f32.mrb[0].mxu0
        %v831 = vadd.f32 %v743, %v830
        %v832 = vpop.f32.mrb[0].mxu0
        %833 = vdwg.mxu0
        %834 = vst [vmem:[%s340] sm:$0xff] %v828
        %835 = vst [vmem:[%s340 + $0x8] sm:$0xff] %v831
        %s836 = sand.u32 %s186, 1
        %s837 = scalar_lea.sflag [#allocation4], %s836
        %s838 = sand.u32 %s186, 1
        %s839 = smul.addr %s838, 16
        %s840 = scalar_lea.vmem [#allocation10], %s839
        // Predicated region
        $region65: #{tpu_custom_call.1} parent=47 // pred_check
          %p841 = pneg %p196
        $region66: #{tpu_custom_call.1} parent=47 // pred_check_branch
          %843 = sbr.rel (%p841) target = $region68
        $region67: #{tpu_custom_call.1} parent=47 // pred_region
          %s844 = smul.u32 2, %s26
          %s846 = ssub.s32 256, 256
          %847 = vsyncadd %s837, %s846
          %s848 = smul.addr %s844, 128
          %s849 = scalar_lea.hbm %s7, %s848
          %s850 = sshll.u32 %s840, 4
          %s851 = int_to_ptr.vmem [resolvable:$true] %s850
          %856 = dma.vmem_to_hbm [thread:$0]  %s851, 256, %s849, %s837, 128, 128, 8
        $region68: #{tpu_custom_call.1} parent=47 // pred_fallthru
          _
      $region48: #{tpu_custom_call.1} parent=5 // pred_fallthru
        _
      %p857 = scmp.le.s32.totalorder 2, %s21
      // Predicated region
      $region69: #{tpu_custom_call.1} parent=5 // pred_check
        %p858 = pneg %p857
      $region70: #{tpu_custom_call.1} parent=5 // pred_check_branch
        %860 = sbr.rel (%p858) target = $region72
      $region71: #{tpu_custom_call.1} parent=5 // pred_region
        %s861 = ssub.s32 %s21, 2
        // Predicated region
        $region73: #{tpu_custom_call.1} parent=71 // pred_check
          %p862 = pneg %p202
        $region74: #{tpu_custom_call.1} parent=71 // pred_check_branch
          %864 = sbr.rel (%p862) target = $region76
        $region75: #{tpu_custom_call.1} parent=71 // pred_region
          %s865 = sand.u32 %s187, 1
          %s866 = scalar_lea.sflag [#allocation4], %s865
          %s867 = sand.u32 %s187, 1
          %s868 = smul.addr %s867, 16
          %s869 = scalar_lea.vmem [#allocation10], %s868
          %870 = dma.done %s866, 256
        $region76: #{tpu_custom_call.1} parent=71 // pred_fallthru
          _
      $region72: #{tpu_custom_call.1} parent=5 // pred_fallthru
        _
    $region6: #{tpu_custom_call.1} parent=1 // loop_footer
      %s25 = sadd.s32 1, %s21
    $region7: #{tpu_custom_call.1} parent=1 // loop_footer_branch
      %20 = sbr.rel target = $region3
    $region8: #{tpu_custom_call.1} parent=1 // loop_exit
      _
    %871 = vsyncpa [#allocation3], 1
    %s872 = scalar_lea.sflag [#allocation3], 1
    %873 = vsyncpa %s872, 1
    %874 = vsyncpa [#allocation6], 1
    %875 = vsyncpa [#allocation9], 1
    %876 = vsyncpa [#allocation4], 1
    %s877 = scalar_lea.sflag [#allocation4], 1
    %878 = vsyncpa %s877, 1

// kernel: tpu_custom_call.1
$region0: #{tpu_custom_call.1}
  #allocation0 [shape = 'u32[]', space=smem, size = 0x4, offset = 0x4, fixed_abs, tag = 'smem constant byte address 0x4 - core index']
  #allocation1 [shape = 'u32[144,128]{1,0:T(1,128)}', space=vmem, size = 0x12000, scoped, tag = 'internal scratch']
  %s0 = inlined_call_operand.hbm [shape: f32[32,128], index: 0, kind: input, shape index: {}]
  %s1 = inlined_call_operand.hbm [shape: bf16[128,128], index: 1, kind: input, shape index: {}]
  %s2 = inlined_call_operand.vmem [shape: f32[1,128], index: 2, kind: input, shape index: {}]
  %s3 = inlined_call_operand.hbm [shape: bf16[2,128,128], index: 3, kind: input, shape index: {}]
  %s4 = inlined_call_operand.vmem [shape: f32[2,1,128], index: 4, kind: input, shape index: {}]
  %s5 = inlined_call_operand.hbm [shape: bf16[128,128], index: 5, kind: input, shape index: {}]
  %s6 = inlined_call_operand.vmem [shape: f32[1,128], index: 6, kind: input, shape index: {}]
  %s7 = inlined_call_operand.hbm [shape: f32[32,128], index: 7, kind: output, shape index: {}]
  %s8 = sld [smem:[#allocation0]]
  $region77: #{tpu_custom_call.1} parent=0
    _
  %s10 = ssub.s32 1, %s8
  %s11 = scalar_select 0, %s10, %s8
  $region1: #{tpu_custom_call.1} parent=0
    #allocation2 [shape = 'u8[16384]{0}', space=vmem, size = 0x4000, scoped, tag = 'input window, operand 0']
    #allocation3 [shape = 's32[2]{0}', space=sflag, size = 0x8, scoped, tag = 'scoped memory for tpu_custom_call.1']
    #allocation4 [shape = 's32[2]{0}', space=sflag, size = 0x8, scoped, tag = 'scoped memory for tpu_custom_call.1']
    #allocation5 [shape = 'u8[32768]{0}', space=vmem, size = 0x8000, scoped, tag = 'input window, operand 1, single buffered']
    #allocation6 [shape = 's32[1]{0}', space=sflag, size = 0x4, scoped, tag = 'scoped memory for tpu_custom_call.1']
    #allocation7 [shape = 'u8[65536]{0}', space=vmem, size = 0x10000, scoped, tag = 'input window, operand 3, single buffered']
    #allocation8 [shape = 'u8[32768]{0}', space=vmem, size = 0x8000, scoped, tag = 'input window, operand 5, single buffered']
    #allocation9 [shape = 's32[1]{0}', space=sflag, size = 0x4, scoped, tag = 'scoped memory for tpu_custom_call.1']
    #allocation10 [shape = 'u8[16384]{0}', space=vmem, size = 0x4000, scoped, tag = 'output window, operand 0']
    %12 = vsyncpa [#allocation3], 0
    %s13 = scalar_lea.sflag [#allocation3], 1
    %14 = vsyncpa %s13, 0
    %15 = vsyncpa [#allocation6], 0
    %16 = vsyncpa [#allocation9], 0
    %17 = vsyncpa [#allocation4], 0
    %s18 = scalar_lea.sflag [#allocation4], 1
    %19 = vsyncpa %s18, 0
    loop: start=0, step=1, limit=4
    $region2: #{tpu_custom_call.1} parent=1 // loop_pre_header
      _
    $region3: #{tpu_custom_call.1} parent=1 // loop_header
      %s21 = sphi 0, %s25
      %p22 = scmp.ge.s32.totalorder %s21, 4
      %s31 = sphi 0, %s33
      %s34 = sphi 0, %s31
      %s35 = sphi 0, %s34
      %s51 = sphi 0, %s35
      %s55 = sphi 0, %s55
      %s57 = sphi 0, %s55
      %s58 = sphi 0, %s57
      %s72 = sphi 0, %s58
      %s76 = sphi 0, %s76
      %s78 = sphi 0, %s76
      %s79 = sphi 0, %s78
      %s93 = sphi 0, %s79
      %s97 = sphi 0, %s97
      %s99 = sphi 0, %s97
      %s100 = sphi 0, %s99
      %s114 = sphi 0, %s100
      %s118 = sphi 0, %s118
      %s120 = sphi 0, %s118
      %s121 = sphi 0, %s120
      %s135 = sphi 0, %s121
      %s139 = sphi 0, %s139
      %s141 = sphi 0, %s139
      %s142 = sphi 0, %s141
      %s156 = sphi 0, %s142
      %s160 = sphi 0, %s160
      %s162 = sphi 0, %s160
      %s163 = sphi 0, %s162
      %s177 = sphi 0, %s163
      %s183 = sphi 0, %s185
      %s186 = sphi 0, %s183
      %s187 = sphi 0, %s186
      %s203 = sphi 0, %s187
    $region4: #{tpu_custom_call.1} parent=1 // loop_header_branch
      %24 = sbr.rel (%p22) target = $region8
    $region5: #{tpu_custom_call.1} parent=1 // loop_body
      %s26 = ssub.s32 %s21, 1
      %s27 = ssub.s32 %s21, 2
      %s28 = sadd.s32 %s21, 1
      %s29 = ssub.s32 %s21, %s28
      %p30 = scmp.eq.s32.totalorder %s29, 0
      %s32 = sadd.s32 %s31, 1
      %s33 = scalar_select %p30, %s31, %s32
      %p36 = pneg %p30
      %p37 = scmp.eq.s32.totalorder %s21, 1
      %p38 = por %p36, %p37
      %p39 = scmp.ne.s32.totalorder %s31, %s34
      %p40 = scmp.eq.s32.totalorder %s21, 0
      %p41 = por %p39, %p40
      %p42 = scmp.ne.s32.totalorder %s31, %s34
      %p43 = scmp.eq.s32.totalorder %s26, 1
      %p44 = por %p42, %p43
      %p45 = scmp.ne.s32.totalorder %s34, %s35
      %p46 = scmp.eq.s32.totalorder %s26, 0
      %p47 = por %p45, %p46
      %p48 = scmp.ne.s32.totalorder %s34, %s35
      %p49 = scmp.eq.s32.totalorder %s27, 1
      %p50 = por %p48, %p49
      %p52 = scmp.ne.s32.totalorder %s35, %s51
      %p53 = scmp.eq.s32.totalorder %s27, 0
      %p54 = por %p52, %p53
      %s56 = sadd.s32 %s55, 1
      %p59 = scmp.eq.s32.totalorder %s21, 1
      %p60 = scmp.ne.s32.totalorder %s55, %s57
      %p61 = scmp.eq.s32.totalorder %s21, 0
      %p62 = por %p60, %p61
      %p63 = scmp.ne.s32.totalorder %s55, %s57
      %p64 = scmp.eq.s32.totalorder %s26, 1
      %p65 = por %p63, %p64
      %p66 = scmp.ne.s32.totalorder %s57, %s58
      %p67 = scmp.eq.s32.totalorder %s26, 0
      %p68 = por %p66, %p67
      %p69 = scmp.ne.s32.totalorder %s57, %s58
      %p70 = scmp.eq.s32.totalorder %s27, 1
      %p71 = por %p69, %p70
      %p73 = scmp.ne.s32.totalorder %s58, %s72
      %p74 = scmp.eq.s32.totalorder %s27, 0
      %p75 = por %p73, %p74
      %s77 = sadd.s32 %s76, 1
      %p80 = scmp.eq.s32.totalorder %s21, 1
      %p81 = scmp.ne.s32.totalorder %s76, %s78
      %p82 = scmp.eq.s32.totalorder %s21, 0
      %p83 = por %p81, %p82
      %p84 = scmp.ne.s32.totalorder %s76, %s78
      %p85 = scmp.eq.s32.totalorder %s26, 1
      %p86 = por %p84, %p85
      %p87 = scmp.ne.s32.totalorder %s78, %s79
      %p88 = scmp.eq.s32.totalorder %s26, 0
      %p89 = por %p87, %p88
      %p90 = scmp.ne.s32.totalorder %s78, %s79
      %p91 = scmp.eq.s32.totalorder %s27, 1
      %p92 = por %p90, %p91
      %p94 = scmp.ne.s32.totalorder %s79, %s93
      %p95 = scmp.eq.s32.totalorder %s27, 0
      %p96 = por %p94, %p95
      %s98 = sadd.s32 %s97, 1
      %p101 = scmp.eq.s32.totalorder %s21, 1
      %p102 = scmp.ne.s32.totalorder %s97, %s99
      %p103 = scmp.eq.s32.totalorder %s21, 0
      %p104 = por %p102, %p103
      %p105 = scmp.ne.s32.totalorder %s97, %s99
      %p106 = scmp.eq.s32.totalorder %s26, 1
      %p107 = por %p105, %p106
      %p108 = scmp.ne.s32.totalorder %s99, %s100
      %p109 = scmp.eq.s32.totalorder %s26, 0
      %p110 = por %p108, %p109
      %p111 = scmp.ne.s32.totalorder %s99, %s100
      %p112 = scmp.eq.s32.totalorder %s27, 1
      %p113 = por %p111, %p112
      %p115 = scmp.ne.s32.totalorder %s100, %s114
      %p116 = scmp.eq.s32.totalorder %s27, 0
      %p117 = por %p115, %p116
      %s119 = sadd.s32 %s118, 1
      %p122 = scmp.eq.s32.totalorder %s21, 1
      %p123 = scmp.ne.s32.totalorder %s118, %s120
      %p124 = scmp.eq.s32.totalorder %s21, 0
      %p125 = por %p123, %p124
      %p126 = scmp.ne.s32.totalorder %s118, %s120
      %p127 = scmp.eq.s32.totalorder %s26, 1
      %p128 = por %p126, %p127
      %p129 = scmp.ne.s32.totalorder %s120, %s121
      %p130 = scmp.eq.s32.totalorder %s26, 0
      %p131 = por %p129, %p130
      %p132 = scmp.ne.s32.totalorder %s120, %s121
      %p133 = scmp.eq.s32.totalorder %s27, 1
      %p134 = por %p132, %p133
      %p136 = scmp.ne.s32.totalorder %s121, %s135
      %p137 = scmp.eq.s32.totalorder %s27, 0
      %p138 = por %p136, %p137
      %s140 = sadd.s32 %s139, 1
      %p143 = scmp.eq.s32.totalorder %s21, 1
      %p144 = scmp.ne.s32.totalorder %s139, %s141
      %p145 = scmp.eq.s32.totalorder %s21, 0
      %p146 = por %p144, %p145
      %p147 = scmp.ne.s32.totalorder %s139, %s141
      %p148 = scmp.eq.s32.totalorder %s26, 1
      %p149 = por %p147, %p148
      %p150 = scmp.ne.s32.totalorder %s141, %s142
      %p151 = scmp.eq.s32.totalorder %s26, 0
      %p152 = por %p150, %p151
      %p153 = scmp.ne.s32.totalorder %s141, %s142
      %p154 = scmp.eq.s32.totalorder %s27, 1
      %p155 = por %p153, %p154
      %p157 = scmp.ne.s32.totalorder %s142, %s156
      %p158 = scmp.eq.s32.totalorder %s27, 0
      %p159 = por %p157, %p158
      %s161 = sadd.s32 %s160, 1
      %p164 = scmp.eq.s32.totalorder %s21, 1
      %p165 = scmp.ne.s32.totalorder %s160, %s162
      %p166 = scmp.eq.s32.totalorder %s21, 0
      %p167 = por %p165, %p166
      %p168 = scmp.ne.s32.totalorder %s160, %s162
      %p169 = scmp.eq.s32.totalorder %s26, 1
      %p170 = por %p168, %p169
      %p171 = scmp.ne.s32.totalorder %s162, %s163
      %p172 = scmp.eq.s32.totalorder %s26, 0
      %p173 = por %p171, %p172
      %p174 = scmp.ne.s32.totalorder %s162, %s163
      %p175 = scmp.eq.s32.totalorder %s27, 1
      %p176 = por %p174, %p175
      %p178 = scmp.ne.s32.totalorder %s163, %s177
      %p179 = scmp.eq.s32.totalorder %s27, 0
      %p180 = por %p178, %p179
      %s181 = ssub.s32 %s21, %s28
      %p182 = scmp.eq.s32.totalorder %s181, 0
      %s184 = sadd.s32 %s183, 1
      %s185 = scalar_select %p182, %s183, %s184
      %p188 = pneg %p182
      %p189 = scmp.eq.s32.totalorder %s21, 1
      %p190 = por %p188, %p189
      %p191 = scmp.ne.s32.totalorder %s183, %s186
      %p192 = scmp.eq.s32.totalorder %s21, 0
      %p193 = por %p191, %p192
      %p194 = scmp.ne.s32.totalorder %s183, %s186
      %p195 = scmp.eq.s32.totalorder %s26, 1
      %p196 = por %p194, %p195
      %p197 = scmp.ne.s32.totalorder %s186, %s187
      %p198 = scmp.eq.s32.totalorder %s26, 0
      %p199 = por %p197, %p198
      %p200 = scmp.ne.s32.totalorder %s186, %s187
      %p201 = scmp.eq.s32.totalorder %s27, 1
      %p202 = por %p200, %p201
      %p204 = scmp.ne.s32.totalorder %s187, %s203
      %p205 = scmp.eq.s32.totalorder %s27, 0
      %p206 = por %p204, %p205
      %p207 = scmp.le.s32.totalorder 1, %s21
      %p208 = scmp.lt.s32.totalorder %s21, 3
      %p209 = pnand %p207, %p208
      %p210 = pneg %p209
      // Predicated region
      $region9: #{tpu_custom_call.1} parent=5 // pred_check
        _
      $region10: #{tpu_custom_call.1} parent=5 // pred_check_branch
        %212 = sbr.rel (%p209) target = $region12
      $region11: #{tpu_custom_call.1} parent=5 // pred_region
        %s213 = ssub.s32 %s21, 1
        // Predicated region
        $region13: #{tpu_custom_call.1} parent=11 // pred_check
          %p214 = pneg %p68
        $region14: #{tpu_custom_call.1} parent=11 // pred_check_branch
          %216 = sbr.rel (%p214) target = $region16
        $region15: #{tpu_custom_call.1} parent=11 // pred_region
          %s218 = ssub.s32 1024, 1024
          %219 = vsyncadd [#allocation6], %s218
          %s220 = sshll.u32 [#allocation5], 4
          %s221 = int_to_ptr.vmem [resolvable:$true] %s220
          %226 = dma.hbm_to_vmem [thread:$0]  %s1, 1024, %s221, [#allocation6], 64, 64, 4
        $region16: #{tpu_custom_call.1} parent=11 // pred_fallthru
          _
        // Predicated region
        $region17: #{tpu_custom_call.1} parent=11 // pred_check
          %p227 = pneg %p89
        $region18: #{tpu_custom_call.1} parent=11 // pred_check_branch
          %229 = sbr.rel (%p227) target = $region20
        $region19: #{tpu_custom_call.1} parent=11 // pred_region
          _
        $region20: #{tpu_custom_call.1} parent=11 // pred_fallthru
          _
        // Predicated region
        $region21: #{tpu_custom_call.1} parent=11 // pred_check
          %p230 = pneg %p110
        $region22: #{tpu_custom_call.1} parent=11 // pred_check_branch
          %232 = sbr.rel (%p230) target = $region24
        $region23: #{tpu_custom_call.1} parent=11 // pred_region
          %s234 = ssub.s32 2048, 2048
          %235 = vsyncadd [#allocation6], %s234
          %s236 = sshll.u32 [#allocation7], 4
          %s237 = int_to_ptr.vmem [resolvable:$true] %s236
          %242 = dma.hbm_to_vmem [thread:$0]  %s3, 2048, %s237, [#allocation6], 64, 64, 4
        $region24: #{tpu_custom_call.1} parent=11 // pred_fallthru
          _
        // Predicated region
        $region25: #{tpu_custom_call.1} parent=11 // pred_check
          %p243 = pneg %p131
        $region26: #{tpu_custom_call.1} parent=11 // pred_check_branch
          %245 = sbr.rel (%p243) target = $region28
        $region27: #{tpu_custom_call.1} parent=11 // pred_region
          _
        $region28: #{tpu_custom_call.1} parent=11 // pred_fallthru
          _
        // Predicated region
        $region29: #{tpu_custom_call.1} parent=11 // pred_check
          %p246 = pneg %p152
        $region30: #{tpu_custom_call.1} parent=11 // pred_check_branch
          %248 = sbr.rel (%p246) target = $region32
        $region31: #{tpu_custom_call.1} parent=11 // pred_region
          %s250 = ssub.s32 1024, 1024
          %251 = vsyncadd [#allocation9], %s250
          %s252 = sshll.u32 [#allocation8], 4
          %s253 = int_to_ptr.vmem [resolvable:$true] %s252
          %258 = dma.hbm_to_vmem [thread:$0]  %s5, 1024, %s253, [#allocation9], 64, 64, 4
        $region32: #{tpu_custom_call.1} parent=11 // pred_fallthru
          _
        // Predicated region
        $region33: #{tpu_custom_call.1} parent=11 // pred_check
          %p259 = pneg %p173
        $region34: #{tpu_custom_call.1} parent=11 // pred_check_branch
          %261 = sbr.rel (%p259) target = $region36
        $region35: #{tpu_custom_call.1} parent=11 // pred_region
          _
        $region36: #{tpu_custom_call.1} parent=11 // pred_fallthru
          _
      $region12: #{tpu_custom_call.1} parent=5 // pred_fallthru
        _
      %p262 = scmp.lt.s32.totalorder %s21, 2
      // Predicated region
      $region37: #{tpu_custom_call.1} parent=5 // pred_check
        %p263 = pneg %p262
      $region38: #{tpu_custom_call.1} parent=5 // pred_check_branch
        %265 = sbr.rel (%p263) target = $region40
      $region39: #{tpu_custom_call.1} parent=5 // pred_region
        // Predicated region
        $region41: #{tpu_custom_call.1} parent=39 // pred_check
          %p266 = pneg %p41
        $region42: #{tpu_custom_call.1} parent=39 // pred_check_branch
          %268 = sbr.rel (%p266) target = $region44
        $region43: #{tpu_custom_call.1} parent=39 // pred_region
          %s269 = sand.u32 %s31, 1
          %s270 = scalar_lea.sflag [#allocation3], %s269
          %s271 = sand.u32 %s31, 1
          %s272 = smul.addr %s271, 16
          %s273 = scalar_lea.vmem [#allocation2], %s272
          %s274 = smul.u32 2, %s21
          %s276 = ssub.s32 256, 256
          %277 = vsyncadd %s270, %s276
          %s278 = smul.addr %s274, 128
          %s279 = scalar_lea.hbm %s0, %s278
          %s280 = sshll.u32 %s273, 4
          %s281 = int_to_ptr.vmem [resolvable:$true] %s280
          %286 = dma.hbm_to_vmem [thread:$0]  %s279, 256, %s281, %s270, 128, 128, 8
        $region44: #{tpu_custom_call.1} parent=39 // pred_fallthru
          _
      $region40: #{tpu_custom_call.1} parent=5 // pred_fallthru
        _
      %p287 = scmp.le.s32.totalorder 1, %s21
      %p288 = scmp.lt.s32.totalorder %s21, 3
      %p289 = pnand %p287, %p288
      %p290 = pneg %p289
      // Predicated region
      $region45: #{tpu_custom_call.1} parent=5 // pred_check
        _
      $region46: #{tpu_custom_call.1} parent=5 // pred_check_branch
        %292 = sbr.rel (%p289) target = $region48
      $region47: #{tpu_custom_call.1} parent=5 // pred_region
        %s293 = ssub.s32 %s21, 1
        %s294 = sand.u32 %s34, 1
        %s295 = scalar_lea.sflag [#allocation3], %s294
        %s296 = sand.u32 %s34, 1
        %s297 = smul.addr %s296, 16
        %s298 = scalar_lea.vmem [#allocation2], %s297
        // Predicated region
        $region49: #{tpu_custom_call.1} parent=47 // pred_check
          %p299 = pneg %p47
        $region50: #{tpu_custom_call.1} parent=47 // pred_check_branch
          %301 = sbr.rel (%p299) target = $region52
        $region51: #{tpu_custom_call.1} parent=47 // pred_region
          %302 = dma.done %s295, 256
        $region52: #{tpu_custom_call.1} parent=47 // pred_fallthru
          _
        // Predicated region
        $region53: #{tpu_custom_call.1} parent=47 // pred_check
          %p303 = pneg %p68
        $region54: #{tpu_custom_call.1} parent=47 // pred_check_branch
          %305 = sbr.rel (%p303) target = $region56
        $region55: #{tpu_custom_call.1} parent=47 // pred_region
          %306 = dma.done [#allocation6], 1024
        $region56: #{tpu_custom_call.1} parent=47 // pred_fallthru
          _
        // Predicated region
        $region57: #{tpu_custom_call.1} parent=47 // pred_check
          %p307 = pneg %p110
        $region58: #{tpu_custom_call.1} parent=47 // pred_check_branch
          %309 = sbr.rel (%p307) target = $region60
        $region59: #{tpu_custom_call.1} parent=47 // pred_region
          %310 = dma.done [#allocation6], 2048
        $region60: #{tpu_custom_call.1} parent=47 // pred_fallthru
          _
        // Predicated region
        $region61: #{tpu_custom_call.1} parent=47 // pred_check
          %p311 = pneg %p152
        $region62: #{tpu_custom_call.1} parent=47 // pred_check_branch
          %313 = sbr.rel (%p311) target = $region64
        $region63: #{tpu_custom_call.1} parent=47 // pred_region
          %314 = dma.done [#allocation9], 1024
        $region64: #{tpu_custom_call.1} parent=47 // pred_fallthru
          _
        %s315 = sand.u32 %s34, 1
        %s316 = scalar_lea.sflag [#allocation3], %s315
        %s317 = sand.u32 %s34, 1
        %s318 = smul.addr %s317, 16
        %s319 = scalar_lea.vmem [#allocation2], %s318
        %p320 = pneg %p47
        %p321 = pneg %p44
        %p322 = pneg %p68
        %p323 = pneg %p65
        %p324 = pneg %p89
        %p325 = pneg %p86
        %p326 = pneg %p110
        %p327 = pneg %p107
        %p328 = pneg %p131
        %p329 = pneg %p128
        %p330 = pneg %p152
        %p331 = pneg %p149
        %p332 = pneg %p173
        %p333 = pneg %p170
        %p334 = pneg %p199
        %p335 = pneg %p196
        %s336 = sand.u32 %s186, 1
        %s337 = scalar_lea.sflag [#allocation4], %s336
        %s338 = sand.u32 %s186, 1
        %s339 = smul.addr %s338, 16
        %s340 = scalar_lea.vmem [#allocation10], %s339
        %s341 = smul.u32 2, %s26
        %s342 = smul.u32 2, %s26
        %v344 = vld [vmem:[%s298] sm:$0xff]
        %v345 = vld [vmem:[%s298 + $0x8] sm:$0xff]
        %v346 = vpack.c.bf16 %v345, %v344
        %v347 = vld [vmem:[#allocation5] sm:$0xf]
        %v348 = vld [vmem:[#allocation5 + $0x4] sm:$0xf]
        %v349 = vld [vmem:[#allocation5 + $0x8] sm:$0xf]
        %v350 = vld [vmem:[#allocation5 + $0xc] sm:$0xf]
        %v351 = vld [vmem:[#allocation5 + $0x10] sm:$0xf]
        %v352 = vld [vmem:[#allocation5 + $0x14] sm:$0xf]
        %v353 = vld [vmem:[#allocation5 + $0x18] sm:$0xf]
        %v354 = vld [vmem:[#allocation5 + $0x1c] sm:$0xf]
        %v355 = vld [vmem:[#allocation5 + $0x20] sm:$0xf]
        %v356 = vld [vmem:[#allocation5 + $0x24] sm:$0xf]
        %v357 = vld [vmem:[#allocation5 + $0x28] sm:$0xf]
        %v358 = vld [vmem:[#allocation5 + $0x2c] sm:$0xf]
        %v359 = vld [vmem:[#allocation5 + $0x30] sm:$0xf]
        %v360 = vld [vmem:[#allocation5 + $0x34] sm:$0xf]
        %v361 = vld [vmem:[#allocation5 + $0x38] sm:$0xf]
        %v362 = vld [vmem:[#allocation5 + $0x3c] sm:$0xf]
        %v363 = vld [vmem:[%s2] sm:$0x1]
        %v365 = vlaneseq
        %v366 = vshrl.u32 %v365, 7
        %v367 = vsub.s32 0, %v366
        %v368 = vrot.slane %v363, %v367
        %v386 = vunpack.c.l.b16 %v347
        %v387 = vunpack.c.l.b16 %v348
        %v388 = vunpack.c.l.b16 %v349
        %v389 = vunpack.c.l.b16 %v350
        %v390 = vunpack.c.l.b16 %v351
        %v391 = vunpack.c.l.b16 %v352
        %v392 = vunpack.c.l.b16 %v353
        %v393 = vunpack.c.l.b16 %v354
        %v394 = vunpack.c.l.b16 %v355
        %v395 = vunpack.c.l.b16 %v356
        %v396 = vunpack.c.l.b16 %v357
        %v397 = vunpack.c.l.b16 %v358
        %v398 = vunpack.c.l.b16 %v359
        %v399 = vunpack.c.l.b16 %v360
        %v400 = vunpack.c.l.b16 %v361
        %v401 = vunpack.c.l.b16 %v362
        %v402 = vpack.c.b16 %v387, %v386
        %v403 = vpack.c.b16 %v389, %v388
        %v404 = vpack.c.b16 %v391, %v390
        %v405 = vpack.c.b16 %v393, %v392
        %v406 = vpack.c.b16 %v395, %v394
        %v407 = vpack.c.b16 %v397, %v396
        %v408 = vpack.c.b16 %v399, %v398
        %v409 = vpack.c.b16 %v401, %v400
        %418 = vmatprep.subr.bf16.mxu0 0
        %419 = vmatpush1.bf16.msra.mxu0 %v402
        %420 = vmatprep.subr.bf16.mxu0 0
        %421 = vmatpush1.bf16.msra.mxu0 %v403
        %422 = vmatprep.subr.bf16.mxu0 0
        %423 = vmatpush1.bf16.msra.mxu0 %v404
        %424 = vmatprep.subr.bf16.mxu0 0
        %425 = vmatpush1.bf16.msra.mxu0 %v405
        %426 = vmatprep.subr.bf16.mxu0 0
        %427 = vmatpush1.bf16.msra.mxu0 %v406
        %428 = vmatprep.subr.bf16.mxu0 0
        %429 = vmatpush1.bf16.msra.mxu0 %v407
        %430 = vmatprep.subr.bf16.mxu0 0
        %431 = vmatpush1.bf16.msra.mxu0 %v408
        %432 = vmatprep.subr.bf16.mxu0 0
        %433 = vmatpush1.bf16.msra.mxu0 %v409
        %434 = vmatprep.subr.bf16.mxu0 0
        %435 = vmatpush1.bf16.msra.mxu0 0
        %436 = vmatprep.subr.bf16.mxu0 0
        %437 = vmatpush1.bf16.msra.mxu0 0
        %438 = vmatprep.subr.bf16.mxu0 0
        %439 = vmatpush1.bf16.msra.mxu0 0
        %440 = vmatprep.subr.bf16.mxu0 0
        %441 = vmatpush1.bf16.msra.mxu0 0
        %442 = vmatprep.subr.bf16.mxu0 0
        %443 = vmatpush1.bf16.msra.mxu0 0
        %444 = vmatprep.subr.bf16.mxu0 0
        %445 = vmatpush1.bf16.msra.mxu0 0
        %446 = vmatprep.subr.bf16.mxu0 0
        %447 = vmatpush1.bf16.msra.mxu0 0
        %448 = vmatprep.subr.bf16.mxu0 0
        %449 = vmatpush1.bf16.msra.mxu0 0
        %450 = vmatprep.mubr.bf16.mxu0 0
        %451 = vmatmul.mubr.bf16.gmra.mrb[0].mxu0 %v346
        %v452 = vpop.f32.mrb[0].mxu0
        %v453 = vadd.f32 %v368, %v452
        %v454 = vpop.f32.mrb[0].mxu0
        %v455 = vpop.f32.mrb[0].mxu0
        %v456 = vadd.f32 %v368, %v455
        %v457 = vpop.f32.mrb[0].mxu0
        %458 = vdwg.mxu0
        %v459 = vmul.f32 %v453, 0.5
        %v460 = vmul.f32 %v456, 0.5
        %v461 = vmul.f32 %v453, 0.70710677
        %v462 = vmul.f32 %v456, 0.70710677
        %v463 = verf.f32.pop %v461
        %v464 = verf.f32.pop %v462
        %v465 = vadd.f32 %v463, 1.0
        %v466 = vadd.f32 %v464, 1.0
        %v467 = vmul.f32 %v459, %v465
        %v468 = vmul.f32 %v460, %v466
        %v469 = vpack.c.bf16 %v468, %v467
        %v470 = vld [vmem:[#allocation7] sm:$0xf]
        %v471 = vld [vmem:[#allocation7 + $0x4] sm:$0xf]
        %v472 = vld [vmem:[#allocation7 + $0x8] sm:$0xf]
        %v473 = vld [vmem:[#allocation7 + $0xc] sm:$0xf]
        %v474 = vld [vmem:[#allocation7 + $0x10] sm:$0xf]
        %v475 = vld [vmem:[#allocation7 + $0x14] sm:$0xf]
        %v476 = vld [vmem:[#allocation7 + $0x18] sm:$0xf]
        %v477 = vld [vmem:[#allocation7 + $0x1c] sm:$0xf]
        %v478 = vld [vmem:[#allocation7 + $0x20] sm:$0xf]
        %v479 = vld [vmem:[#allocation7 + $0x24] sm:$0xf]
        %v480 = vld [vmem:[#allocation7 + $0x28] sm:$0xf]
        %v481 = vld [vmem:[#allocation7 + $0x2c] sm:$0xf]
        %v482 = vld [vmem:[#allocation7 + $0x30] sm:$0xf]
        %v483 = vld [vmem:[#allocation7 + $0x34] sm:$0xf]
        %v484 = vld [vmem:[#allocation7 + $0x38] sm:$0xf]
        %v485 = vld [vmem:[#allocation7 + $0x3c] sm:$0xf]
        %v486 = vld [vmem:[%s4] sm:$0x1]
        %v488 = vlaneseq
        %v489 = vshrl.u32 %v488, 7
        %v490 = vsub.s32 0, %v489
        %v491 = vrot.slane %v486, %v490
        %v509 = vunpack.c.l.b16 %v470
        %v510 = vunpack.c.l.b16 %v471
        %v511 = vunpack.c.l.b16 %v472
        %v512 = vunpack.c.l.b16 %v473
        %v513 = vunpack.c.l.b16 %v474
        %v514 = vunpack.c.l.b16 %v475
        %v515 = vunpack.c.l.b16 %v476
        %v516 = vunpack.c.l.b16 %v477
        %v517 = vunpack.c.l.b16 %v478
        %v518 = vunpack.c.l.b16 %v479
        %v519 = vunpack.c.l.b16 %v480
        %v520 = vunpack.c.l.b16 %v481
        %v521 = vunpack.c.l.b16 %v482
        %v522 = vunpack.c.l.b16 %v483
        %v523 = vunpack.c.l.b16 %v484
        %v524 = vunpack.c.l.b16 %v485
        %v525 = vpack.c.b16 %v510, %v509
        %v526 = vpack.c.b16 %v512, %v511
        %v527 = vpack.c.b16 %v514, %v513
        %v528 = vpack.c.b16 %v516, %v515
        %v529 = vpack.c.b16 %v518, %v517
        %v530 = vpack.c.b16 %v520, %v519
        %v531 = vpack.c.b16 %v522, %v521
        %v532 = vpack.c.b16 %v524, %v523
        %541 = vmatprep.subr.bf16.mxu0 0
        %542 = vmatpush1.bf16.msra.mxu0 %v525
        %543 = vmatprep.subr.bf16.mxu0 0
        %544 = vmatpush1.bf16.msra.mxu0 %v526
        %545 = vmatprep.subr.bf16.mxu0 0
        %546 = vmatpush1.bf16.msra.mxu0 %v527
        %547 = vmatprep.subr.bf16.mxu0 0
        %548 = vmatpush1.bf16.msra.mxu0 %v528
        %549 = vmatprep.subr.bf16.mxu0 0
        %550 = vmatpush1.bf16.msra.mxu0 %v529
        %551 = vmatprep.subr.bf16.mxu0 0
        %552 = vmatpush1.bf16.msra.mxu0 %v530
        %553 = vmatprep.subr.bf16.mxu0 0
        %554 = vmatpush1.bf16.msra.mxu0 %v531
        %555 = vmatprep.subr.bf16.mxu0 0
        %556 = vmatpush1.bf16.msra.mxu0 %v532
        %557 = vmatprep.subr.bf16.mxu0 0
        %558 = vmatpush1.bf16.msra.mxu0 0
        %559 = vmatprep.subr.bf16.mxu0 0
        %560 = vmatpush1.bf16.msra.mxu0 0
        %561 = vmatprep.subr.bf16.mxu0 0
        %562 = vmatpush1.bf16.msra.mxu0 0
        %563 = vmatprep.subr.bf16.mxu0 0
        %564 = vmatpush1.bf16.msra.mxu0 0
        %565 = vmatprep.subr.bf16.mxu0 0
        %566 = vmatpush1.bf16.msra.mxu0 0
        %567 = vmatprep.subr.bf16.mxu0 0
        %568 = vmatpush1.bf16.msra.mxu0 0
        %569 = vmatprep.subr.bf16.mxu0 0
        %570 = vmatpush1.bf16.msra.mxu0 0
        %571 = vmatprep.subr.bf16.mxu0 0
        %572 = vmatpush1.bf16.msra.mxu0 0
        %573 = vmatprep.mubr.bf16.mxu0 0
        %574 = vmatmul.mubr.bf16.gmra.mrb[0].mxu0 %v469
        %v575 = vpop.f32.mrb[0].mxu0
        %v576 = vadd.f32 %v491, %v575
        %v577 = vpop.f32.mrb[0].mxu0
        %v578 = vpop.f32.mrb[0].mxu0
        %v579 = vadd.f32 %v491, %v578
        %v580 = vpop.f32.mrb[0].mxu0
        %581 = vdwg.mxu0
        %v582 = vmul.f32 %v576, 0.5
        %v583 = vmul.f32 %v579, 0.5
        %v584 = vmul.f32 %v576, 0.70710677
        %v585 = vmul.f32 %v579, 0.70710677
        %v586 = verf.f32.pop %v584
        %v587 = verf.f32.pop %v585
        %v588 = vadd.f32 %v586, 1.0
        %v589 = vadd.f32 %v587, 1.0
        %v590 = vmul.f32 %v582, %v588
        %v591 = vmul.f32 %v583, %v589
        %v592 = vadd.f32 %v590, %v467
        %v593 = vadd.f32 %v591, %v468
        %v594 = vpack.c.bf16 %v593, %v592
        %s595 = scalar_lea.vmem [#allocation7], 64
        %v596 = vld [vmem:[%s595] sm:$0xf]
        %v597 = vld [vmem:[%s595 + $0x4] sm:$0xf]
        %v598 = vld [vmem:[%s595 + $0x8] sm:$0xf]
        %v599 = vld [vmem:[%s595 + $0xc] sm:$0xf]
        %v600 = vld [vmem:[%s595 + $0x10] sm:$0xf]
        %v601 = vld [vmem:[%s595 + $0x14] sm:$0xf]
        %v602 = vld [vmem:[%s595 + $0x18] sm:$0xf]
        %v603 = vld [vmem:[%s595 + $0x1c] sm:$0xf]
        %v604 = vld [vmem:[%s595 + $0x20] sm:$0xf]
        %v605 = vld [vmem:[%s595 + $0x24] sm:$0xf]
        %v606 = vld [vmem:[%s595 + $0x28] sm:$0xf]
        %v607 = vld [vmem:[%s595 + $0x2c] sm:$0xf]
        %v608 = vld [vmem:[%s595 + $0x30] sm:$0xf]
        %v609 = vld [vmem:[%s595 + $0x34] sm:$0xf]
        %v610 = vld [vmem:[%s595 + $0x38] sm:$0xf]
        %v611 = vld [vmem:[%s595 + $0x3c] sm:$0xf]
        %s612 = scalar_lea.vmem %s4, 1
        %v613 = vld [vmem:[%s612] sm:$0x1]
        %v615 = vlaneseq
        %v616 = vshrl.u32 %v615, 7
        %v617 = vsub.s32 0, %v616
        %v618 = vrot.slane %v613, %v617
        %v636 = vunpack.c.l.b16 %v596
        %v637 = vunpack.c.l.b16 %v597
        %v638 = vunpack.c.l.b16 %v598
        %v639 = vunpack.c.l.b16 %v599
        %v640 = vunpack.c.l.b16 %v600
        %v641 = vunpack.c.l.b16 %v601
        %v642 = vunpack.c.l.b16 %v602
        %v643 = vunpack.c.l.b16 %v603
        %v644 = vunpack.c.l.b16 %v604
        %v645 = vunpack.c.l.b16 %v605
        %v646 = vunpack.c.l.b16 %v606
        %v647 = vunpack.c.l.b16 %v607
        %v648 = vunpack.c.l.b16 %v608
        %v649 = vunpack.c.l.b16 %v609
        %v650 = vunpack.c.l.b16 %v610
        %v651 = vunpack.c.l.b16 %v611
        %v652 = vpack.c.b16 %v637, %v636
        %v653 = vpack.c.b16 %v639, %v638
        %v654 = vpack.c.b16 %v641, %v640
        %v655 = vpack.c.b16 %v643, %v642
        %v656 = vpack.c.b16 %v645, %v644
        %v657 = vpack.c.b16 %v647, %v646
        %v658 = vpack.c.b16 %v649, %v648
        %v659 = vpack.c.b16 %v651, %v650
        %668 = vmatprep.subr.bf16.mxu0 0
        %669 = vmatpush1.bf16.msra.mxu0 %v652
        %670 = vmatprep.subr.bf16.mxu0 0
        %671 = vmatpush1.bf16.msra.mxu0 %v653
        %672 = vmatprep.subr.bf16.mxu0 0
        %673 = vmatpush1.bf16.msra.mxu0 %v654
        %674 = vmatprep.subr.bf16.mxu0 0
        %675 = vmatpush1.bf16.msra.mxu0 %v655
        %676 = vmatprep.subr.bf16.mxu0 0
        %677 = vmatpush1.bf16.msra.mxu0 %v656
        %678 = vmatprep.subr.bf16.mxu0 0
        %679 = vmatpush1.bf16.msra.mxu0 %v657
        %680 = vmatprep.subr.bf16.mxu0 0
        %681 = vmatpush1.bf16.msra.mxu0 %v658
        %682 = vmatprep.subr.bf16.mxu0 0
        %683 = vmatpush1.bf16.msra.mxu0 %v659
        %684 = vmatprep.subr.bf16.mxu0 0
        %685 = vmatpush1.bf16.msra.mxu0 0
        %686 = vmatprep.subr.bf16.mxu0 0
        %687 = vmatpush1.bf16.msra.mxu0 0
        %688 = vmatprep.subr.bf16.mxu0 0
        %689 = vmatpush1.bf16.msra.mxu0 0
        %690 = vmatprep.subr.bf16.mxu0 0
        %691 = vmatpush1.bf16.msra.mxu0 0
        %692 = vmatprep.subr.bf16.mxu0 0
        %693 = vmatpush1.bf16.msra.mxu0 0
        %694 = vmatprep.subr.bf16.mxu0 0
        %695 = vmatpush1.bf16.msra.mxu0 0
        %696 = vmatprep.subr.bf16.mxu0 0
        %697 = vmatpush1.bf16.msra.mxu0 0
        %698 = vmatprep.subr.bf16.mxu0 0
        %699 = vmatpush1.bf16.msra.mxu0 0
        %700 = vmatprep.mubr.bf16.mxu0 0
        %701 = vmatmul.mubr.bf16.gmra.mrb[0].mxu0 %v594
        %v702 = vpop.f32.mrb[0].mxu0
        %v703 = vadd.f32 %v618, %v702
        %v704 = vpop.f32.mrb[0].mxu0
        %v705 = vpop.f32.mrb[0].mxu0
        %v706 = vadd.f32 %v618, %v705
        %v707 = vpop.f32.mrb[0].mxu0
        %708 = vdwg.mxu0
        %v709 = vmul.f32 %v703, 0.5
        %v710 = vmul.f32 %v706, 0.5
        %v711 = vmul.f32 %v703, 0.70710677
        %v712 = vmul.f32 %v706, 0.70710677
        %v713 = verf.f32.pop %v711
        %v714 = verf.f32.pop %v712
        %v715 = vadd.f32 %v713, 1.0
        %v716 = vadd.f32 %v714, 1.0
        %v717 = vmul.f32 %v709, %v715
        %v718 = vmul.f32 %v710, %v716
        %v719 = vadd.f32 %v717, %v592
        %v720 = vadd.f32 %v718, %v593
        %v721 = vpack.c.bf16 %v720, %v719
        %v722 = vld [vmem:[#allocation8] sm:$0xf]
        %v723 = vld [vmem:[#allocation8 + $0x4] sm:$0xf]
        %v724 = vld [vmem:[#allocation8 + $0x8] sm:$0xf]
        %v725 = vld [vmem:[#allocation8 + $0xc] sm:$0xf]
        %v726 = vld [vmem:[#allocation8 + $0x10] sm:$0xf]
        %v727 = vld [vmem:[#allocation8 + $0x14] sm:$0xf]
        %v728 = vld [vmem:[#allocation8 + $0x18] sm:$0xf]
        %v729 = vld [vmem:[#allocation8 + $0x1c] sm:$0xf]
        %v730 = vld [vmem:[#allocation8 + $0x20] sm:$0xf]
        %v731 = vld [vmem:[#allocation8 + $0x24] sm:$0xf]
        %v732 = vld [vmem:[#allocation8 + $0x28] sm:$0xf]
        %v733 = vld [vmem:[#allocation8 + $0x2c] sm:$0xf]
        %v734 = vld [vmem:[#allocation8 + $0x30] sm:$0xf]
        %v735 = vld [vmem:[#allocation8 + $0x34] sm:$0xf]
        %v736 = vld [vmem:[#allocation8 + $0x38] sm:$0xf]
        %v737 = vld [vmem:[#allocation8 + $0x3c] sm:$0xf]
        %v738 = vld [vmem:[%s6] sm:$0x1]
        %v740 = vlaneseq
        %v741 = vshrl.u32 %v740, 7
        %v742 = vsub.s32 0, %v741
        %v743 = vrot.slane %v738, %v742
        %v761 = vunpack.c.l.b16 %v722
        %v762 = vunpack.c.l.b16 %v723
        %v763 = vunpack.c.l.b16 %v724
        %v764 = vunpack.c.l.b16 %v725
        %v765 = vunpack.c.l.b16 %v726
        %v766 = vunpack.c.l.b16 %v727
        %v767 = vunpack.c.l.b16 %v728
        %v768 = vunpack.c.l.b16 %v729
        %v769 = vunpack.c.l.b16 %v730
        %v770 = vunpack.c.l.b16 %v731
        %v771 = vunpack.c.l.b16 %v732
        %v772 = vunpack.c.l.b16 %v733
        %v773 = vunpack.c.l.b16 %v734
        %v774 = vunpack.c.l.b16 %v735
        %v775 = vunpack.c.l.b16 %v736
        %v776 = vunpack.c.l.b16 %v737
        %v777 = vpack.c.b16 %v762, %v761
        %v778 = vpack.c.b16 %v764, %v763
        %v779 = vpack.c.b16 %v766, %v765
        %v780 = vpack.c.b16 %v768, %v767
        %v781 = vpack.c.b16 %v770, %v769
        %v782 = vpack.c.b16 %v772, %v771
        %v783 = vpack.c.b16 %v774, %v773
        %v784 = vpack.c.b16 %v776, %v775
        %793 = vmatprep.subr.bf16.mxu0 0
        %794 = vmatpush1.bf16.msra.mxu0 %v777
        %795 = vmatprep.subr.bf16.mxu0 0
        %796 = vmatpush1.bf16.msra.mxu0 %v778
        %797 = vmatprep.subr.bf16.mxu0 0
        %798 = vmatpush1.bf16.msra.mxu0 %v779
        %799 = vmatprep.subr.bf16.mxu0 0
        %800 = vmatpush1.bf16.msra.mxu0 %v780
        %801 = vmatprep.subr.bf16.mxu0 0
        %802 = vmatpush1.bf16.msra.mxu0 %v781
        %803 = vmatprep.subr.bf16.mxu0 0
        %804 = vmatpush1.bf16.msra.mxu0 %v782
        %805 = vmatprep.subr.bf16.mxu0 0
        %806 = vmatpush1.bf16.msra.mxu0 %v783
        %807 = vmatprep.subr.bf16.mxu0 0
        %808 = vmatpush1.bf16.msra.mxu0 %v784
        %809 = vmatprep.subr.bf16.mxu0 0
        %810 = vmatpush1.bf16.msra.mxu0 0
        %811 = vmatprep.subr.bf16.mxu0 0
        %812 = vmatpush1.bf16.msra.mxu0 0
        %813 = vmatprep.subr.bf16.mxu0 0
        %814 = vmatpush1.bf16.msra.mxu0 0
        %815 = vmatprep.subr.bf16.mxu0 0
        %816 = vmatpush1.bf16.msra.mxu0 0
        %817 = vmatprep.subr.bf16.mxu0 0
        %818 = vmatpush1.bf16.msra.mxu0 0
        %819 = vmatprep.subr.bf16.mxu0 0
        %820 = vmatpush1.bf16.msra.mxu0 0
        %821 = vmatprep.subr.bf16.mxu0 0
        %822 = vmatpush1.bf16.msra.mxu0 0
        %823 = vmatprep.subr.bf16.mxu0 0
        %824 = vmatpush1.bf16.msra.mxu0 0
        %825 = vmatprep.mubr.bf16.mxu0 0
        %826 = vmatmul.mubr.bf16.gmra.mrb[0].mxu0 %v721
        %v827 = vpop.f32.mrb[0].mxu0
        %v828 = vadd.f32 %v743, %v827
        %v829 = vpop.f32.mrb[0].mxu0
        %v830 = vpop.f32.mrb[0].mxu0
        %v831 = vadd.f32 %v743, %v830
        %v832 = vpop.f32.mrb[0].mxu0
        %833 = vdwg.mxu0
        %834 = vst [vmem:[%s340] sm:$0xff] %v828
        %835 = vst [vmem:[%s340 + $0x8] sm:$0xff] %v831
        %s836 = sand.u32 %s186, 1
        %s837 = scalar_lea.sflag [#allocation4], %s836
        %s838 = sand.u32 %s186, 1
        %s839 = smul.addr %s838, 16
        %s840 = scalar_lea.vmem [#allocation10], %s839
        // Predicated region
        $region65: #{tpu_custom_call.1} parent=47 // pred_check
          %p841 = pneg %p196
        $region66: #{tpu_custom_call.1} parent=47 // pred_check_branch
          %843 = sbr.rel (%p841) target = $region68
        $region67: #{tpu_custom_call.1} parent=47 // pred_region
          %s844 = smul.u32 2, %s26
          %s846 = ssub.s32 256, 256
          %847 = vsyncadd %s837, %s846
          %s848 = smul.addr %s844, 128
          %s849 = scalar_lea.hbm %s7, %s848
          %s850 = sshll.u32 %s840, 4
          %s851 = int_to_ptr.vmem [resolvable:$true] %s850
          %856 = dma.vmem_to_hbm [thread:$0]  %s851, 256, %s849, %s837, 128, 128, 8
        $region68: #{tpu_custom_call.1} parent=47 // pred_fallthru
          _
      $region48: #{tpu_custom_call.1} parent=5 // pred_fallthru
        _
      %p857 = scmp.le.s32.totalorder 2, %s21
      // Predicated region
      $region69: #{tpu_custom_call.1} parent=5 // pred_check
        %p858 = pneg %p857
      $region70: #{tpu_custom_call.1} parent=5 // pred_check_branch
        %860 = sbr.rel (%p858) target = $region72
      $region71: #{tpu_custom_call.1} parent=5 // pred_region
        %s861 = ssub.s32 %s21, 2
        // Predicated region
        $region73: #{tpu_custom_call.1} parent=71 // pred_check
          %p862 = pneg %p202
        $region74: #{tpu_custom_call.1} parent=71 // pred_check_branch
          %864 = sbr.rel (%p862) target = $region76
        $region75: #{tpu_custom_call.1} parent=71 // pred_region
          %s865 = sand.u32 %s187, 1
          %s866 = scalar_lea.sflag [#allocation4], %s865
          %s867 = sand.u32 %s187, 1
          %s868 = smul.addr %s867, 16
          %s869 = scalar_lea.vmem [#allocation10], %s868
          %870 = dma.done %s866, 256
        $region76: #{tpu_custom_call.1} parent=71 // pred_fallthru
          _
      $region72: #{tpu_custom_call.1} parent=5 // pred_fallthru
        _
    $region6: #{tpu_custom_call.1} parent=1 // loop_footer
      %s25 = sadd.s32 1, %s21
    $region7: #{tpu_custom_call.1} parent=1 // loop_footer_branch
      %20 = sbr.rel target = $region3
    $region8: #{tpu_custom_call.1} parent=1 // loop_exit
      _
    %871 = vsyncpa [#allocation3], 1
    %s872 = scalar_lea.sflag [#allocation3], 1
    %873 = vsyncpa %s872, 1
    %874 = vsyncpa [#allocation6], 1
    %875 = vsyncpa [#allocation9], 1
    %876 = vsyncpa [#allocation4], 1
    %s877 = scalar_lea.sflag [#allocation4], 1
    %878 = vsyncpa %s877, 1

</llo_original>
